<compile_context>
chip_gen: v7x
topology: tpu7x:2x2x1
jax: 0.10.0
libtpu: 0.0.40
codegen_flags: <defaults>
</compile_context>

<pallas_src>
import functools

import jax
import jax.numpy as jnp
from jax.experimental import pallas as pl
from jax.experimental.pallas import tpu as pltpu


def _bert_embeddings_kernel(ids_ref,        # SMEM (B, S) int32    [scalar prefetch]
                            we_hbm,         # HBM  (V, H)          [pl.ANY, gathered]
                            te_ref,         # VMEM (T, H)          resident
                            pos_ref,        # VMEM (TS, H)         per-tile
                            gamma_ref,      # VMEM (1, H)          resident
                            beta_ref,       # VMEM (1, H)          resident
                            tok_ref,        # VMEM (1, TS, 1) i32  per-tile
                            out_ref,        # VMEM (1, TS, H)      per-tile
                            wbuf,           # VMEM scratch (TS, H) gathered word rows
                            sem,            # DMA semaphores (TS,)
                            *, eps, ts):
    b = pl.program_id(0)
    s = pl.program_id(1)
    s0 = s * ts
    f32 = jnp.float32

    # --- word-embedding row gather: TS small HBM->VMEM DMAs, issued together ---
    copies = []
    for r in range(ts):
        row = ids_ref[b, s0 + r]
        cp = pltpu.make_async_copy(we_hbm.at[row], wbuf.at[r], sem.at[r])
        cp.start()
        copies.append(cp)

    # --- position + token-type contribution (pure VPU) while DMAs are in flight ---
    tt = tok_ref[...][0]                       # (TS, 1) int32
    pt = pos_ref[...].astype(f32)              # (TS, H)
    n_types = te_ref.shape[0]                  # tiny (2 for BERT): select, no MXU
    for t in range(n_types):
        pt = pt + (tt == t).astype(f32) * te_ref[t].astype(f32)

    for cp in copies:
        cp.wait()

    x = wbuf[...].astype(f32) + pt             # (TS, H)

    # --- BertLayerNorm: gamma * (x - u) / sqrt(var + eps) + beta (f32 math) ---
    u = jnp.mean(x, axis=-1, keepdims=True)
    xc = x - u
    var = jnp.mean(xc * xc, axis=-1, keepdims=True)
    xn = xc * jax.lax.rsqrt(var + eps)
    y = gamma_ref[...].astype(f32) * xn + beta_ref[...].astype(f32)

    out_ref[...] = y[None].astype(out_ref.dtype)
    # TODO(synk): dropout omitted (identity in eval mode).


def bert_embeddings_pallas(input_ids, token_type_ids, params, *, eps=1e-12,
                           out_dtype=jnp.float32, tile_seq=None):
    """input_ids, token_type_ids: (B, S) int. Returns (B, S, H) in out_dtype."""
    B, S = input_ids.shape
    V, H = params["word_emb"].shape
    T = params["type_emb"].shape[0]
    P = params["pos_emb"].shape[0]
    assert P >= S, "max position embeddings must cover sequence length"
    assert S % 8 == 0, "sequence length must be a multiple of 8 for (8,128) tiling"

    if tile_seq is None:
        # largest multiple-of-8 divisor of S, capped at 512 rows per tile
        tile_seq = 8
        for cand in range(8, min(S, 512) + 1, 8):
            if S % cand == 0:
                tile_seq = cand
    TS = tile_seq
    assert S % TS == 0 and TS % 8 == 0

    ids = input_ids.astype(jnp.int32)                       # -> SMEM (scalar prefetch)
    tok = token_type_ids.astype(jnp.int32).reshape(B, S, 1)  # lane dim 1, tiny tiles

    kernel = functools.partial(_bert_embeddings_kernel, eps=eps, ts=TS)

    out = pl.pallas_call(
        kernel,
        out_shape=jax.ShapeDtypeStruct((B, S, H), out_dtype),
        grid_spec=pltpu.PrefetchScalarGridSpec(
            num_scalar_prefetch=1,
            grid=(B, S // TS),
            in_specs=[
                pl.BlockSpec(memory_space=pl.ANY),                        # word_emb (HBM)
                pl.BlockSpec((T, H), lambda b, s, ids: (0, 0)),           # type_emb resident
                pl.BlockSpec((TS, H), lambda b, s, ids: (s, 0)),          # pos_emb tile
                pl.BlockSpec((1, H), lambda b, s, ids: (0, 0)),           # gamma
                pl.BlockSpec((1, H), lambda b, s, ids: (0, 0)),           # beta
                pl.BlockSpec((1, TS, 1), lambda b, s, ids: (b, s, 0)),    # token-type tile
            ],
            out_specs=pl.BlockSpec((1, TS, H), lambda b, s, ids: (b, s, 0)),
            scratch_shapes=[
                pltpu.VMEM((TS, H), params["word_emb"].dtype),            # gathered rows
                pltpu.SemaphoreType.DMA((TS,)),
            ],
        ),
        compiler_params=pltpu.CompilerParams(
            dimension_semantics=("parallel", "parallel"),
            vmem_limit_bytes=32 * 1024 * 1024,
        ),
    )(ids, params["word_emb"], params["type_emb"], params["pos_emb"],
      params["gamma"], params["beta"], tok)
    return out


def vlayer0_forward(input0, input1, input2, params):
    """Mirrors vLayer0.forward: returns (BertEmbeddings(input0, input1), input2)."""
    out6 = bert_embeddings_pallas(input0, input1, params)
    return out6, input2


def _reference(input_ids, token_type_ids, params, eps=1e-12):
    B, S = input_ids.shape
    we = params["word_emb"][input_ids]
    pe = params["pos_emb"][jnp.arange(S)][None, :, :]
    te = params["type_emb"][token_type_ids]
    x = we + pe + te
    u = x.mean(-1, keepdims=True)
    s = ((x - u) ** 2).mean(-1, keepdims=True)
    xn = (x - u) / jnp.sqrt(s + eps)
    return params["gamma"].reshape(-1) * xn + params["beta"].reshape(-1)


if __name__ == "__main__":
    # Small synthetic BERT config.
    VOCAB = 128
    MAX_POS = 32
    TYPE_VOCAB = 2
    HIDDEN = 32
    INIT_RANGE = 0.02
    B, S = 2, 8

    key = jax.random.PRNGKey(0)
    k_we, k_pe, k_te, k_g, k_b, k_ids, k_tok, k_mask = jax.random.split(key, 8)

    params = {
        "word_emb": INIT_RANGE * jax.random.normal(k_we, (VOCAB, HIDDEN), jnp.float32),
        "pos_emb": INIT_RANGE * jax.random.normal(k_pe, (MAX_POS, HIDDEN), jnp.float32),
        "type_emb": INIT_RANGE * jax.random.normal(k_te, (TYPE_VOCAB, HIDDEN), jnp.float32),
        # init_bert_weights draws gamma/beta from N(0, initializer_range) too.
        "gamma": INIT_RANGE * jax.random.normal(k_g, (1, HIDDEN), jnp.float32),
        "beta": INIT_RANGE * jax.random.normal(k_b, (1, HIDDEN), jnp.float32),
    }

    input0 = jax.random.randint(k_ids, (B, S), 0, VOCAB, dtype=jnp.int32)       # input_ids
    input1 = jax.random.randint(k_tok, (B, S), 0, TYPE_VOCAB, dtype=jnp.int32)  # token_type_ids
    input2 = jnp.ones((B, 1, 1, S), jnp.float32)                                # passthrough mask

    out6, out2 = vlayer0_forward(input0, input1, input2, params)
    jax.block_until_ready((out6, out2))

    ref = _reference(input0, input1, params)
    assert out6.shape == (B, S, HIDDEN)
    assert jnp.allclose(out6, ref, atol=1e-5, rtol=1e-5), "mismatch vs reference"
    assert jnp.array_equal(out2, input2)
    print("KERNEL_OK")
</pallas_src>

<mosaic_0001>
module attributes {stable_mosaic.version = 11 : i64} {
  func.func @_bert_embeddings_kernel(%arg0: i32, %arg1: i32, %arg2: memref<2x8xi32, #tpu.memory_space<smem>>, %arg3: memref<128x32xf32, #tpu.memory_space<any>>, %arg4: memref<2x32xf32, #tpu.memory_space<vmem>>, %arg5: memref<8x32xf32, #tpu.memory_space<vmem>>, %arg6: memref<1x32xf32, #tpu.memory_space<vmem>>, %arg7: memref<1x32xf32, #tpu.memory_space<vmem>>, %arg8: memref<1x8x1xi32, #tpu.memory_space<vmem>>, %arg9: memref<1x8x32xf32, #tpu.memory_space<vmem>>, %arg10: memref<8x32xf32, #tpu.memory_space<vmem>>, %arg11: memref<8x!tpu.dma_semaphore, #tpu.memory_space<semaphore_mem>>) attributes {dimension_semantics = [#tpu.dimension_semantics<parallel>, #tpu.dimension_semantics<parallel>], iteration_bounds = array<i64: 2, 1>, scalar_prefetch = 1 : i64, scratch_operands = 2 : i64, tpu.core_type = #tpu.core_type<tc>, window_params = [{}, {pipeline_mode = #tpu.pipeline_mode<synchronous>, transform_indices = @transform_1, window_bounds = array<i64: 2, 32>}, {transform_indices = @transform_2, window_bounds = array<i64: 8, 32>}, {pipeline_mode = #tpu.pipeline_mode<synchronous>, transform_indices = @transform_3, window_bounds = array<i64: 1, 32>}, {pipeline_mode = #tpu.pipeline_mode<synchronous>, transform_indices = @transform_4, window_bounds = array<i64: 1, 32>}, {transform_indices = @transform_5, window_bounds = array<i64: 1, 8, 1>}, {transform_indices = @transform_6, window_bounds = array<i64: 1, 8, 32>}]} {
    %c8_i32 = arith.constant 8 : i32
    %0 = arith.muli %arg1, %c8_i32 : i32
    %c0_i32 = arith.constant 0 : i32
    %1 = arith.addi %0, %c0_i32 : i32
    %2 = arith.index_cast %arg0 : i32 to index
    %3 = arith.index_cast %1 : i32 to index
    %4 = memref.load %arg2[%2, %3] : memref<2x8xi32, #tpu.memory_space<smem>>
    %c0_i32_0 = arith.constant 0 : i32
    %c0_i32_1 = arith.constant 0 : i32
    %c0_i32_2 = arith.constant 0 : i32
    %5 = tpu.memref_slice %arg3[%4, %c0_i32_2] : memref<128x32xf32, #tpu.memory_space<any>> -> memref<1x32xf32, #tpu.memory_space<any>>
    %6 = tpu.memref_squeeze %5 : memref<1x32xf32, #tpu.memory_space<any>> -> memref<32xf32, #tpu.memory_space<any>>
    %c0_i32_3 = arith.constant 0 : i32
    %7 = tpu.memref_slice %arg10[%c0_i32_0, %c0_i32_3] : memref<8x32xf32, #tpu.memory_space<vmem>> -> memref<1x32xf32, #tpu.memory_space<vmem>>
    %8 = tpu.memref_squeeze %7 : memref<1x32xf32, #tpu.memory_space<vmem>> -> memref<32xf32, #tpu.memory_space<vmem>>
    %9 = tpu.memref_slice %arg11[%c0_i32_1] : memref<8x!tpu.dma_semaphore, #tpu.memory_space<semaphore_mem>> -> memref<1x!tpu.dma_semaphore, #tpu.memory_space<semaphore_mem>>
    %10 = tpu.memref_squeeze %9 : memref<1x!tpu.dma_semaphore, #tpu.memory_space<semaphore_mem>> -> memref<!tpu.dma_semaphore, #tpu.memory_space<semaphore_mem>>
    tpu.enqueue_dma source(%6 : memref<32xf32, #tpu.memory_space<any>>) target(%8 : memref<32xf32, #tpu.memory_space<vmem>>) target_semaphore(%10 : memref<!tpu.dma_semaphore, #tpu.memory_space<semaphore_mem>>)
    %c1_i32 = arith.constant 1 : i32
    %11 = arith.addi %0, %c1_i32 : i32
    %12 = arith.index_cast %arg0 : i32 to index
    %13 = arith.index_cast %11 : i32 to index
    %14 = memref.load %arg2[%12, %13] : memref<2x8xi32, #tpu.memory_space<smem>>
    %c1_i32_4 = arith.constant 1 : i32
    %c1_i32_5 = arith.constant 1 : i32
    %c0_i32_6 = arith.constant 0 : i32
    %15 = tpu.memref_slice %arg3[%14, %c0_i32_6] : memref<128x32xf32, #tpu.memory_space<any>> -> memref<1x32xf32, #tpu.memory_space<any>>
    %16 = tpu.memref_squeeze %15 : memref<1x32xf32, #tpu.memory_space<any>> -> memref<32xf32, #tpu.memory_space<any>>
    %c0_i32_7 = arith.constant 0 : i32
    %17 = tpu.memref_slice %arg10[%c1_i32_4, %c0_i32_7] : memref<8x32xf32, #tpu.memory_space<vmem>> -> memref<1x32xf32, #tpu.memory_space<vmem>>
    %18 = tpu.memref_squeeze %17 : memref<1x32xf32, #tpu.memory_space<vmem>> -> memref<32xf32, #tpu.memory_space<vmem>>
    %19 = tpu.memref_slice %arg11[%c1_i32_5] : memref<8x!tpu.dma_semaphore, #tpu.memory_space<semaphore_mem>> -> memref<1x!tpu.dma_semaphore, #tpu.memory_space<semaphore_mem>>
    %20 = tpu.memref_squeeze %19 : memref<1x!tpu.dma_semaphore, #tpu.memory_space<semaphore_mem>> -> memref<!tpu.dma_semaphore, #tpu.memory_space<semaphore_mem>>
    tpu.enqueue_dma source(%16 : memref<32xf32, #tpu.memory_space<any>>) target(%18 : memref<32xf32, #tpu.memory_space<vmem>>) target_semaphore(%20 : memref<!tpu.dma_semaphore, #tpu.memory_space<semaphore_mem>>)
    %c2_i32 = arith.constant 2 : i32
    %21 = arith.addi %0, %c2_i32 : i32
    %22 = arith.index_cast %arg0 : i32 to index
    %23 = arith.index_cast %21 : i32 to index
    %24 = memref.load %arg2[%22, %23] : memref<2x8xi32, #tpu.memory_space<smem>>
    %c2_i32_8 = arith.constant 2 : i32
    %c2_i32_9 = arith.constant 2 : i32
    %c0_i32_10 = arith.constant 0 : i32
    %25 = tpu.memref_slice %arg3[%24, %c0_i32_10] : memref<128x32xf32, #tpu.memory_space<any>> -> memref<1x32xf32, #tpu.memory_space<any>>
    %26 = tpu.memref_squeeze %25 : memref<1x32xf32, #tpu.memory_space<any>> -> memref<32xf32, #tpu.memory_space<any>>
    %c0_i32_11 = arith.constant 0 : i32
    %27 = tpu.memref_slice %arg10[%c2_i32_8, %c0_i32_11] : memref<8x32xf32, #tpu.memory_space<vmem>> -> memref<1x32xf32, #tpu.memory_space<vmem>>
    %28 = tpu.memref_squeeze %27 : memref<1x32xf32, #tpu.memory_space<vmem>> -> memref<32xf32, #tpu.memory_space<vmem>>
    %29 = tpu.memref_slice %arg11[%c2_i32_9] : memref<8x!tpu.dma_semaphore, #tpu.memory_space<semaphore_mem>> -> memref<1x!tpu.dma_semaphore, #tpu.memory_space<semaphore_mem>>
    %30 = tpu.memref_squeeze %29 : memref<1x!tpu.dma_semaphore, #tpu.memory_space<semaphore_mem>> -> memref<!tpu.dma_semaphore, #tpu.memory_space<semaphore_mem>>
    tpu.enqueue_dma source(%26 : memref<32xf32, #tpu.memory_space<any>>) target(%28 : memref<32xf32, #tpu.memory_space<vmem>>) target_semaphore(%30 : memref<!tpu.dma_semaphore, #tpu.memory_space<semaphore_mem>>)
    %c3_i32 = arith.constant 3 : i32
    %31 = arith.addi %0, %c3_i32 : i32
    %32 = arith.index_cast %arg0 : i32 to index
    %33 = arith.index_cast %31 : i32 to index
    %34 = memref.load %arg2[%32, %33] : memref<2x8xi32, #tpu.memory_space<smem>>
    %c3_i32_12 = arith.constant 3 : i32
    %c3_i32_13 = arith.constant 3 : i32
    %c0_i32_14 = arith.constant 0 : i32
    %35 = tpu.memref_slice %arg3[%34, %c0_i32_14] : memref<128x32xf32, #tpu.memory_space<any>> -> memref<1x32xf32, #tpu.memory_space<any>>
    %36 = tpu.memref_squeeze %35 : memref<1x32xf32, #tpu.memory_space<any>> -> memref<32xf32, #tpu.memory_space<any>>
    %c0_i32_15 = arith.constant 0 : i32
    %37 = tpu.memref_slice %arg10[%c3_i32_12, %c0_i32_15] : memref<8x32xf32, #tpu.memory_space<vmem>> -> memref<1x32xf32, #tpu.memory_space<vmem>>
    %38 = tpu.memref_squeeze %37 : memref<1x32xf32, #tpu.memory_space<vmem>> -> memref<32xf32, #tpu.memory_space<vmem>>
    %39 = tpu.memref_slice %arg11[%c3_i32_13] : memref<8x!tpu.dma_semaphore, #tpu.memory_space<semaphore_mem>> -> memref<1x!tpu.dma_semaphore, #tpu.memory_space<semaphore_mem>>
    %40 = tpu.memref_squeeze %39 : memref<1x!tpu.dma_semaphore, #tpu.memory_space<semaphore_mem>> -> memref<!tpu.dma_semaphore, #tpu.memory_space<semaphore_mem>>
    tpu.enqueue_dma source(%36 : memref<32xf32, #tpu.memory_space<any>>) target(%38 : memref<32xf32, #tpu.memory_space<vmem>>) target_semaphore(%40 : memref<!tpu.dma_semaphore, #tpu.memory_space<semaphore_mem>>)
    %c4_i32 = arith.constant 4 : i32
    %41 = arith.addi %0, %c4_i32 : i32
    %42 = arith.index_cast %arg0 : i32 to index
    %43 = arith.index_cast %41 : i32 to index
    %44 = memref.load %arg2[%42, %43] : memref<2x8xi32, #tpu.memory_space<smem>>
    %c4_i32_16 = arith.constant 4 : i32
    %c4_i32_17 = arith.constant 4 : i32
    %c0_i32_18 = arith.constant 0 : i32
    %45 = tpu.memref_slice %arg3[%44, %c0_i32_18] : memref<128x32xf32, #tpu.memory_space<any>> -> memref<1x32xf32, #tpu.memory_space<any>>
    %46 = tpu.memref_squeeze %45 : memref<1x32xf32, #tpu.memory_space<any>> -> memref<32xf32, #tpu.memory_space<any>>
    %c0_i32_19 = arith.constant 0 : i32
    %47 = tpu.memref_slice %arg10[%c4_i32_16, %c0_i32_19] : memref<8x32xf32, #tpu.memory_space<vmem>> -> memref<1x32xf32, #tpu.memory_space<vmem>>
    %48 = tpu.memref_squeeze %47 : memref<1x32xf32, #tpu.memory_space<vmem>> -> memref<32xf32, #tpu.memory_space<vmem>>
    %49 = tpu.memref_slice %arg11[%c4_i32_17] : memref<8x!tpu.dma_semaphore, #tpu.memory_space<semaphore_mem>> -> memref<1x!tpu.dma_semaphore, #tpu.memory_space<semaphore_mem>>
    %50 = tpu.memref_squeeze %49 : memref<1x!tpu.dma_semaphore, #tpu.memory_space<semaphore_mem>> -> memref<!tpu.dma_semaphore, #tpu.memory_space<semaphore_mem>>
    tpu.enqueue_dma source(%46 : memref<32xf32, #tpu.memory_space<any>>) target(%48 : memref<32xf32, #tpu.memory_space<vmem>>) target_semaphore(%50 : memref<!tpu.dma_semaphore, #tpu.memory_space<semaphore_mem>>)
    %c5_i32 = arith.constant 5 : i32
    %51 = arith.addi %0, %c5_i32 : i32
    %52 = arith.index_cast %arg0 : i32 to index
    %53 = arith.index_cast %51 : i32 to index
    %54 = memref.load %arg2[%52, %53] : memref<2x8xi32, #tpu.memory_space<smem>>
    %c5_i32_20 = arith.constant 5 : i32
    %c5_i32_21 = arith.constant 5 : i32
    %c0_i32_22 = arith.constant 0 : i32
    %55 = tpu.memref_slice %arg3[%54, %c0_i32_22] : memref<128x32xf32, #tpu.memory_space<any>> -> memref<1x32xf32, #tpu.memory_space<any>>
    %56 = tpu.memref_squeeze %55 : memref<1x32xf32, #tpu.memory_space<any>> -> memref<32xf32, #tpu.memory_space<any>>
    %c0_i32_23 = arith.constant 0 : i32
    %57 = tpu.memref_slice %arg10[%c5_i32_20, %c0_i32_23] : memref<8x32xf32, #tpu.memory_space<vmem>> -> memref<1x32xf32, #tpu.memory_space<vmem>>
    %58 = tpu.memref_squeeze %57 : memref<1x32xf32, #tpu.memory_space<vmem>> -> memref<32xf32, #tpu.memory_space<vmem>>
    %59 = tpu.memref_slice %arg11[%c5_i32_21] : memref<8x!tpu.dma_semaphore, #tpu.memory_space<semaphore_mem>> -> memref<1x!tpu.dma_semaphore, #tpu.memory_space<semaphore_mem>>
    %60 = tpu.memref_squeeze %59 : memref<1x!tpu.dma_semaphore, #tpu.memory_space<semaphore_mem>> -> memref<!tpu.dma_semaphore, #tpu.memory_space<semaphore_mem>>
    tpu.enqueue_dma source(%56 : memref<32xf32, #tpu.memory_space<any>>) target(%58 : memref<32xf32, #tpu.memory_space<vmem>>) target_semaphore(%60 : memref<!tpu.dma_semaphore, #tpu.memory_space<semaphore_mem>>)
    %c6_i32 = arith.constant 6 : i32
    %61 = arith.addi %0, %c6_i32 : i32
    %62 = arith.index_cast %arg0 : i32 to index
    %63 = arith.index_cast %61 : i32 to index
    %64 = memref.load %arg2[%62, %63] : memref<2x8xi32, #tpu.memory_space<smem>>
    %c6_i32_24 = arith.constant 6 : i32
    %c6_i32_25 = arith.constant 6 : i32
    %c0_i32_26 = arith.constant 0 : i32
    %65 = tpu.memref_slice %arg3[%64, %c0_i32_26] : memref<128x32xf32, #tpu.memory_space<any>> -> memref<1x32xf32, #tpu.memory_space<any>>
    %66 = tpu.memref_squeeze %65 : memref<1x32xf32, #tpu.memory_space<any>> -> memref<32xf32, #tpu.memory_space<any>>
    %c0_i32_27 = arith.constant 0 : i32
    %67 = tpu.memref_slice %arg10[%c6_i32_24, %c0_i32_27] : memref<8x32xf32, #tpu.memory_space<vmem>> -> memref<1x32xf32, #tpu.memory_space<vmem>>
    %68 = tpu.memref_squeeze %67 : memref<1x32xf32, #tpu.memory_space<vmem>> -> memref<32xf32, #tpu.memory_space<vmem>>
    %69 = tpu.memref_slice %arg11[%c6_i32_25] : memref<8x!tpu.dma_semaphore, #tpu.memory_space<semaphore_mem>> -> memref<1x!tpu.dma_semaphore, #tpu.memory_space<semaphore_mem>>
    %70 = tpu.memref_squeeze %69 : memref<1x!tpu.dma_semaphore, #tpu.memory_space<semaphore_mem>> -> memref<!tpu.dma_semaphore, #tpu.memory_space<semaphore_mem>>
    tpu.enqueue_dma source(%66 : memref<32xf32, #tpu.memory_space<any>>) target(%68 : memref<32xf32, #tpu.memory_space<vmem>>) target_semaphore(%70 : memref<!tpu.dma_semaphore, #tpu.memory_space<semaphore_mem>>)
    %c7_i32 = arith.constant 7 : i32
    %71 = arith.addi %0, %c7_i32 : i32
    %72 = arith.index_cast %arg0 : i32 to index
    %73 = arith.index_cast %71 : i32 to index
    %74 = memref.load %arg2[%72, %73] : memref<2x8xi32, #tpu.memory_space<smem>>
    %c7_i32_28 = arith.constant 7 : i32
    %c7_i32_29 = arith.constant 7 : i32
    %c0_i32_30 = arith.constant 0 : i32
    %75 = tpu.memref_slice %arg3[%74, %c0_i32_30] : memref<128x32xf32, #tpu.memory_space<any>> -> memref<1x32xf32, #tpu.memory_space<any>>
    %76 = tpu.memref_squeeze %75 : memref<1x32xf32, #tpu.memory_space<any>> -> memref<32xf32, #tpu.memory_space<any>>
    %c0_i32_31 = arith.constant 0 : i32
    %77 = tpu.memref_slice %arg10[%c7_i32_28, %c0_i32_31] : memref<8x32xf32, #tpu.memory_space<vmem>> -> memref<1x32xf32, #tpu.memory_space<vmem>>
    %78 = tpu.memref_squeeze %77 : memref<1x32xf32, #tpu.memory_space<vmem>> -> memref<32xf32, #tpu.memory_space<vmem>>
    %79 = tpu.memref_slice %arg11[%c7_i32_29] : memref<8x!tpu.dma_semaphore, #tpu.memory_space<semaphore_mem>> -> memref<1x!tpu.dma_semaphore, #tpu.memory_space<semaphore_mem>>
    %80 = tpu.memref_squeeze %79 : memref<1x!tpu.dma_semaphore, #tpu.memory_space<semaphore_mem>> -> memref<!tpu.dma_semaphore, #tpu.memory_space<semaphore_mem>>
    tpu.enqueue_dma source(%76 : memref<32xf32, #tpu.memory_space<any>>) target(%78 : memref<32xf32, #tpu.memory_space<vmem>>) target_semaphore(%80 : memref<!tpu.dma_semaphore, #tpu.memory_space<semaphore_mem>>)
    %c0 = arith.constant 0 : index
    %c0_32 = arith.constant 0 : index
    %c0_33 = arith.constant 0 : index
    %81 = vector.load %arg8[%c0, %c0_32, %c0_33] : memref<1x8x1xi32, #tpu.memory_space<vmem>>, vector<1x8x1xi32>
    %82 = vector.shape_cast %81 : vector<1x8x1xi32> to vector<8x1xi32>
    %c0_34 = arith.constant 0 : index
    %c0_35 = arith.constant 0 : index
    %83 = vector.load %arg5[%c0_34, %c0_35] : memref<8x32xf32, #tpu.memory_space<vmem>>, vector<8x32xf32>
    %c0_i32_36 = arith.constant 0 : i32
    %84 = vector.broadcast %c0_i32_36 : i32 to vector<8x1xi32>
    %85 = arith.cmpi eq, %82, %84 : vector<8x1xi32>
    %86 = arith.extui %85 : vector<8x1xi1> to vector<8x1xi32>
    %87 = arith.sitofp %86 : vector<8x1xi32> to vector<8x1xf32>
    %c0_37 = arith.constant 0 : index
    %c0_38 = arith.constant 0 : index
    %88 = vector.load %arg4[%c0_37, %c0_38] : memref<2x32xf32, #tpu.memory_space<vmem>>, vector<1x32xf32>
    %89 = vector.shape_cast %88 : vector<1x32xf32> to vector<32xf32>
    %90 = vector.shape_cast %89 : vector<32xf32> to vector<1x32xf32>
    %91 = vector.broadcast %87 : vector<8x1xf32> to vector<8x32xf32>
    %92 = vector.broadcast %90 : vector<1x32xf32> to vector<8x32xf32>
    %93 = arith.mulf %91, %92 : vector<8x32xf32>
    %94 = arith.addf %83, %93 : vector<8x32xf32>
    %c1_i32_39 = arith.constant 1 : i32
    %95 = vector.broadcast %c1_i32_39 : i32 to vector<8x1xi32>
    %96 = arith.cmpi eq, %82, %95 : vector<8x1xi32>
    %97 = arith.extui %96 : vector<8x1xi1> to vector<8x1xi32>
    %98 = arith.sitofp %97 : vector<8x1xi32> to vector<8x1xf32>
    %c1 = arith.constant 1 : index
    %c0_40 = arith.constant 0 : index
    %99 = vector.load %arg4[%c1, %c0_40] : memref<2x32xf32, #tpu.memory_space<vmem>>, vector<1x32xf32>
    %100 = vector.shape_cast %99 : vector<1x32xf32> to vector<32xf32>
    %101 = vector.shape_cast %100 : vector<32xf32> to vector<1x32xf32>
    %102 = vector.broadcast %98 : vector<8x1xf32> to vector<8x32xf32>
    %103 = vector.broadcast %101 : vector<1x32xf32> to vector<8x32xf32>
    %104 = arith.mulf %102, %103 : vector<8x32xf32>
    %105 = arith.addf %94, %104 : vector<8x32xf32>
    %c0_i32_41 = arith.constant 0 : i32
    %c0_i32_42 = arith.constant 0 : i32
    %c0_i32_43 = arith.constant 0 : i32
    %106 = tpu.memref_slice %arg3[%4, %c0_i32_43] : memref<128x32xf32, #tpu.memory_space<any>> -> memref<1x32xf32, #tpu.memory_space<any>>
    %107 = tpu.memref_squeeze %106 : memref<1x32xf32, #tpu.memory_space<any>> -> memref<32xf32, #tpu.memory_space<any>>
    %c0_i32_44 = arith.constant 0 : i32
    %108 = tpu.memref_slice %arg10[%c0_i32_41, %c0_i32_44] : memref<8x32xf32, #tpu.memory_space<vmem>> -> memref<1x32xf32, #tpu.memory_space<vmem>>
    %109 = tpu.memref_squeeze %108 : memref<1x32xf32, #tpu.memory_space<vmem>> -> memref<32xf32, #tpu.memory_space<vmem>>
    %110 = tpu.memref_slice %arg11[%c0_i32_42] : memref<8x!tpu.dma_semaphore, #tpu.memory_space<semaphore_mem>> -> memref<1x!tpu.dma_semaphore, #tpu.memory_space<semaphore_mem>>
    %111 = tpu.memref_squeeze %110 : memref<1x!tpu.dma_semaphore, #tpu.memory_space<semaphore_mem>> -> memref<!tpu.dma_semaphore, #tpu.memory_space<semaphore_mem>>
    tpu.wait_dma2 semaphore(%111 : memref<!tpu.dma_semaphore, #tpu.memory_space<semaphore_mem>>) src(%107 : memref<32xf32, #tpu.memory_space<any>>) dst(%109 : memref<32xf32, #tpu.memory_space<vmem>>)
    %c1_i32_45 = arith.constant 1 : i32
    %c1_i32_46 = arith.constant 1 : i32
    %c0_i32_47 = arith.constant 0 : i32
    %112 = tpu.memref_slice %arg3[%14, %c0_i32_47] : memref<128x32xf32, #tpu.memory_space<any>> -> memref<1x32xf32, #tpu.memory_space<any>>
    %113 = tpu.memref_squeeze %112 : memref<1x32xf32, #tpu.memory_space<any>> -> memref<32xf32, #tpu.memory_space<any>>
    %c0_i32_48 = arith.constant 0 : i32
    %114 = tpu.memref_slice %arg10[%c1_i32_45, %c0_i32_48] : memref<8x32xf32, #tpu.memory_space<vmem>> -> memref<1x32xf32, #tpu.memory_space<vmem>>
    %115 = tpu.memref_squeeze %114 : memref<1x32xf32, #tpu.memory_space<vmem>> -> memref<32xf32, #tpu.memory_space<vmem>>
    %116 = tpu.memref_slice %arg11[%c1_i32_46] : memref<8x!tpu.dma_semaphore, #tpu.memory_space<semaphore_mem>> -> memref<1x!tpu.dma_semaphore, #tpu.memory_space<semaphore_mem>>
    %117 = tpu.memref_squeeze %116 : memref<1x!tpu.dma_semaphore, #tpu.memory_space<semaphore_mem>> -> memref<!tpu.dma_semaphore, #tpu.memory_space<semaphore_mem>>
    tpu.wait_dma2 semaphore(%117 : memref<!tpu.dma_semaphore, #tpu.memory_space<semaphore_mem>>) src(%113 : memref<32xf32, #tpu.memory_space<any>>) dst(%115 : memref<32xf32, #tpu.memory_space<vmem>>)
    %c2_i32_49 = arith.constant 2 : i32
    %c2_i32_50 = arith.constant 2 : i32
    %c0_i32_51 = arith.constant 0 : i32
    %118 = tpu.memref_slice %arg3[%24, %c0_i32_51] : memref<128x32xf32, #tpu.memory_space<any>> -> memref<1x32xf32, #tpu.memory_space<any>>
    %119 = tpu.memref_squeeze %118 : memref<1x32xf32, #tpu.memory_space<any>> -> memref<32xf32, #tpu.memory_space<any>>
    %c0_i32_52 = arith.constant 0 : i32
    %120 = tpu.memref_slice %arg10[%c2_i32_49, %c0_i32_52] : memref<8x32xf32, #tpu.memory_space<vmem>> -> memref<1x32xf32, #tpu.memory_space<vmem>>
    %121 = tpu.memref_squeeze %120 : memref<1x32xf32, #tpu.memory_space<vmem>> -> memref<32xf32, #tpu.memory_space<vmem>>
    %122 = tpu.memref_slice %arg11[%c2_i32_50] : memref<8x!tpu.dma_semaphore, #tpu.memory_space<semaphore_mem>> -> memref<1x!tpu.dma_semaphore, #tpu.memory_space<semaphore_mem>>
    %123 = tpu.memref_squeeze %122 : memref<1x!tpu.dma_semaphore, #tpu.memory_space<semaphore_mem>> -> memref<!tpu.dma_semaphore, #tpu.memory_space<semaphore_mem>>
    tpu.wait_dma2 semaphore(%123 : memref<!tpu.dma_semaphore, #tpu.memory_space<semaphore_mem>>) src(%119 : memref<32xf32, #tpu.memory_space<any>>) dst(%121 : memref<32xf32, #tpu.memory_space<vmem>>)
    %c3_i32_53 = arith.constant 3 : i32
    %c3_i32_54 = arith.constant 3 : i32
    %c0_i32_55 = arith.constant 0 : i32
    %124 = tpu.memref_slice %arg3[%34, %c0_i32_55] : memref<128x32xf32, #tpu.memory_space<any>> -> memref<1x32xf32, #tpu.memory_space<any>>
    %125 = tpu.memref_squeeze %124 : memref<1x32xf32, #tpu.memory_space<any>> -> memref<32xf32, #tpu.memory_space<any>>
    %c0_i32_56 = arith.constant 0 : i32
    %126 = tpu.memref_slice %arg10[%c3_i32_53, %c0_i32_56] : memref<8x32xf32, #tpu.memory_space<vmem>> -> memref<1x32xf32, #tpu.memory_space<vmem>>
    %127 = tpu.memref_squeeze %126 : memref<1x32xf32, #tpu.memory_space<vmem>> -> memref<32xf32, #tpu.memory_space<vmem>>
    %128 = tpu.memref_slice %arg11[%c3_i32_54] : memref<8x!tpu.dma_semaphore, #tpu.memory_space<semaphore_mem>> -> memref<1x!tpu.dma_semaphore, #tpu.memory_space<semaphore_mem>>
    %129 = tpu.memref_squeeze %128 : memref<1x!tpu.dma_semaphore, #tpu.memory_space<semaphore_mem>> -> memref<!tpu.dma_semaphore, #tpu.memory_space<semaphore_mem>>
    tpu.wait_dma2 semaphore(%129 : memref<!tpu.dma_semaphore, #tpu.memory_space<semaphore_mem>>) src(%125 : memref<32xf32, #tpu.memory_space<any>>) dst(%127 : memref<32xf32, #tpu.memory_space<vmem>>)
    %c4_i32_57 = arith.constant 4 : i32
    %c4_i32_58 = arith.constant 4 : i32
    %c0_i32_59 = arith.constant 0 : i32
    %130 = tpu.memref_slice %arg3[%44, %c0_i32_59] : memref<128x32xf32, #tpu.memory_space<any>> -> memref<1x32xf32, #tpu.memory_space<any>>
    %131 = tpu.memref_squeeze %130 : memref<1x32xf32, #tpu.memory_space<any>> -> memref<32xf32, #tpu.memory_space<any>>
    %c0_i32_60 = arith.constant 0 : i32
    %132 = tpu.memref_slice %arg10[%c4_i32_57, %c0_i32_60] : memref<8x32xf32, #tpu.memory_space<vmem>> -> memref<1x32xf32, #tpu.memory_space<vmem>>
    %133 = tpu.memref_squeeze %132 : memref<1x32xf32, #tpu.memory_space<vmem>> -> memref<32xf32, #tpu.memory_space<vmem>>
    %134 = tpu.memref_slice %arg11[%c4_i32_58] : memref<8x!tpu.dma_semaphore, #tpu.memory_space<semaphore_mem>> -> memref<1x!tpu.dma_semaphore, #tpu.memory_space<semaphore_mem>>
    %135 = tpu.memref_squeeze %134 : memref<1x!tpu.dma_semaphore, #tpu.memory_space<semaphore_mem>> -> memref<!tpu.dma_semaphore, #tpu.memory_space<semaphore_mem>>
    tpu.wait_dma2 semaphore(%135 : memref<!tpu.dma_semaphore, #tpu.memory_space<semaphore_mem>>) src(%131 : memref<32xf32, #tpu.memory_space<any>>) dst(%133 : memref<32xf32, #tpu.memory_space<vmem>>)
    %c5_i32_61 = arith.constant 5 : i32
    %c5_i32_62 = arith.constant 5 : i32
    %c0_i32_63 = arith.constant 0 : i32
    %136 = tpu.memref_slice %arg3[%54, %c0_i32_63] : memref<128x32xf32, #tpu.memory_space<any>> -> memref<1x32xf32, #tpu.memory_space<any>>
    %137 = tpu.memref_squeeze %136 : memref<1x32xf32, #tpu.memory_space<any>> -> memref<32xf32, #tpu.memory_space<any>>
    %c0_i32_64 = arith.constant 0 : i32
    %138 = tpu.memref_slice %arg10[%c5_i32_61, %c0_i32_64] : memref<8x32xf32, #tpu.memory_space<vmem>> -> memref<1x32xf32, #tpu.memory_space<vmem>>
    %139 = tpu.memref_squeeze %138 : memref<1x32xf32, #tpu.memory_space<vmem>> -> memref<32xf32, #tpu.memory_space<vmem>>
    %140 = tpu.memref_slice %arg11[%c5_i32_62] : memref<8x!tpu.dma_semaphore, #tpu.memory_space<semaphore_mem>> -> memref<1x!tpu.dma_semaphore, #tpu.memory_space<semaphore_mem>>
    %141 = tpu.memref_squeeze %140 : memref<1x!tpu.dma_semaphore, #tpu.memory_space<semaphore_mem>> -> memref<!tpu.dma_semaphore, #tpu.memory_space<semaphore_mem>>
    tpu.wait_dma2 semaphore(%141 : memref<!tpu.dma_semaphore, #tpu.memory_space<semaphore_mem>>) src(%137 : memref<32xf32, #tpu.memory_space<any>>) dst(%139 : memref<32xf32, #tpu.memory_space<vmem>>)
    %c6_i32_65 = arith.constant 6 : i32
    %c6_i32_66 = arith.constant 6 : i32
    %c0_i32_67 = arith.constant 0 : i32
    %142 = tpu.memref_slice %arg3[%64, %c0_i32_67] : memref<128x32xf32, #tpu.memory_space<any>> -> memref<1x32xf32, #tpu.memory_space<any>>
    %143 = tpu.memref_squeeze %142 : memref<1x32xf32, #tpu.memory_space<any>> -> memref<32xf32, #tpu.memory_space<any>>
    %c0_i32_68 = arith.constant 0 : i32
    %144 = tpu.memref_slice %arg10[%c6_i32_65, %c0_i32_68] : memref<8x32xf32, #tpu.memory_space<vmem>> -> memref<1x32xf32, #tpu.memory_space<vmem>>
    %145 = tpu.memref_squeeze %144 : memref<1x32xf32, #tpu.memory_space<vmem>> -> memref<32xf32, #tpu.memory_space<vmem>>
    %146 = tpu.memref_slice %arg11[%c6_i32_66] : memref<8x!tpu.dma_semaphore, #tpu.memory_space<semaphore_mem>> -> memref<1x!tpu.dma_semaphore, #tpu.memory_space<semaphore_mem>>
    %147 = tpu.memref_squeeze %146 : memref<1x!tpu.dma_semaphore, #tpu.memory_space<semaphore_mem>> -> memref<!tpu.dma_semaphore, #tpu.memory_space<semaphore_mem>>
    tpu.wait_dma2 semaphore(%147 : memref<!tpu.dma_semaphore, #tpu.memory_space<semaphore_mem>>) src(%143 : memref<32xf32, #tpu.memory_space<any>>) dst(%145 : memref<32xf32, #tpu.memory_space<vmem>>)
    %c7_i32_69 = arith.constant 7 : i32
    %c7_i32_70 = arith.constant 7 : i32
    %c0_i32_71 = arith.constant 0 : i32
    %148 = tpu.memref_slice %arg3[%74, %c0_i32_71] : memref<128x32xf32, #tpu.memory_space<any>> -> memref<1x32xf32, #tpu.memory_space<any>>
    %149 = tpu.memref_squeeze %148 : memref<1x32xf32, #tpu.memory_space<any>> -> memref<32xf32, #tpu.memory_space<any>>
    %c0_i32_72 = arith.constant 0 : i32
    %150 = tpu.memref_slice %arg10[%c7_i32_69, %c0_i32_72] : memref<8x32xf32, #tpu.memory_space<vmem>> -> memref<1x32xf32, #tpu.memory_space<vmem>>
    %151 = tpu.memref_squeeze %150 : memref<1x32xf32, #tpu.memory_space<vmem>> -> memref<32xf32, #tpu.memory_space<vmem>>
    %152 = tpu.memref_slice %arg11[%c7_i32_70] : memref<8x!tpu.dma_semaphore, #tpu.memory_space<semaphore_mem>> -> memref<1x!tpu.dma_semaphore, #tpu.memory_space<semaphore_mem>>
    %153 = tpu.memref_squeeze %152 : memref<1x!tpu.dma_semaphore, #tpu.memory_space<semaphore_mem>> -> memref<!tpu.dma_semaphore, #tpu.memory_space<semaphore_mem>>
    tpu.wait_dma2 semaphore(%153 : memref<!tpu.dma_semaphore, #tpu.memory_space<semaphore_mem>>) src(%149 : memref<32xf32, #tpu.memory_space<any>>) dst(%151 : memref<32xf32, #tpu.memory_space<vmem>>)
    %c0_73 = arith.constant 0 : index
    %c0_74 = arith.constant 0 : index
    %154 = vector.load %arg10[%c0_73, %c0_74] : memref<8x32xf32, #tpu.memory_space<vmem>>, vector<8x32xf32>
    %155 = arith.addf %154, %105 : vector<8x32xf32>
    %cst = arith.constant dense<0.000000e+00> : vector<8xf32>
    %156 = vector.multi_reduction <add>, %155, %cst [1] : vector<8x32xf32> to vector<8xf32>
    %157 = vector.shape_cast %156 : vector<8xf32> to vector<8x1xf32>
    %cst_75 = arith.constant 3.200000e+01 : f32
    %158 = vector.broadcast %cst_75 : f32 to vector<8x1xf32>
    %159 = arith.divf %157, %158 : vector<8x1xf32>
    %160 = vector.broadcast %159 : vector<8x1xf32> to vector<8x32xf32>
    %161 = arith.subf %155, %160 : vector<8x32xf32>
    %162 = arith.mulf %161, %161 : vector<8x32xf32>
    %cst_76 = arith.constant dense<0.000000e+00> : vector<8xf32>
    %163 = vector.multi_reduction <add>, %162, %cst_76 [1] : vector<8x32xf32> to vector<8xf32>
    %164 = vector.shape_cast %163 : vector<8xf32> to vector<8x1xf32>
    %cst_77 = arith.constant 3.200000e+01 : f32
    %165 = vector.broadcast %cst_77 : f32 to vector<8x1xf32>
    %166 = arith.divf %164, %165 : vector<8x1xf32>
    %cst_78 = arith.constant 9.99999996E-13 : f32
    %167 = vector.broadcast %cst_78 : f32 to vector<8x1xf32>
    %168 = arith.addf %166, %167 : vector<8x1xf32>
    %169 = math.rsqrt %168 : vector<8x1xf32>
    %170 = vector.broadcast %169 : vector<8x1xf32> to vector<8x32xf32>
    %171 = arith.mulf %161, %170 : vector<8x32xf32>
    %c0_79 = arith.constant 0 : index
    %c0_80 = arith.constant 0 : index
    %172 = vector.load %arg6[%c0_79, %c0_80] : memref<1x32xf32, #tpu.memory_space<vmem>>, vector<1x32xf32>
    %173 = vector.broadcast %172 : vector<1x32xf32> to vector<8x32xf32>
    %174 = arith.mulf %173, %171 : vector<8x32xf32>
    %c0_81 = arith.constant 0 : index
    %c0_82 = arith.constant 0 : index
    %175 = vector.load %arg7[%c0_81, %c0_82] : memref<1x32xf32, #tpu.memory_space<vmem>>, vector<1x32xf32>
    %176 = vector.broadcast %175 : vector<1x32xf32> to vector<8x32xf32>
    %177 = arith.addf %174, %176 : vector<8x32xf32>
    %178 = vector.shape_cast %177 : vector<8x32xf32> to vector<1x8x32xf32>
    %c0_83 = arith.constant 0 : index
    %c0_84 = arith.constant 0 : index
    %c0_85 = arith.constant 0 : index
    %179 = vector.load %arg9[%c0_83, %c0_84, %c0_85] : memref<1x8x32xf32, #tpu.memory_space<vmem>>, vector<1x8x32xf32>
    tpu.vector_store %arg9[%c0_83, %c0_84, %c0_85], %178 {strides = array<i32>} : memref<1x8x32xf32, #tpu.memory_space<vmem>>, vector<1x8x32xf32>,
    return
  }
  func.func @transform_1(%arg0: i32, %arg1: i32, %arg2: memref<2x8xi32, #tpu.memory_space<smem>>) -> (i32, i32) {
    %c0_i32 = arith.constant 0 : i32
    %c0_i32_0 = arith.constant 0 : i32
    %c0_i32_1 = arith.constant 0 : i32
    return %c0_i32, %c0_i32_0 : i32, i32
  }
  func.func @transform_2(%arg0: i32, %arg1: i32, %arg2: memref<2x8xi32, #tpu.memory_space<smem>>) -> (i32, i32) {
    %c0_i32 = arith.constant 0 : i32
    %c0_i32_0 = arith.constant 0 : i32
    return %arg1, %c0_i32 : i32, i32
  }
  func.func @transform_3(%arg0: i32, %arg1: i32, %arg2: memref<2x8xi32, #tpu.memory_space<smem>>) -> (i32, i32) {
    %c0_i32 = arith.constant 0 : i32
    %c0_i32_0 = arith.constant 0 : i32
    %c0_i32_1 = arith.constant 0 : i32
    return %c0_i32, %c0_i32_0 : i32, i32
  }
  func.func @transform_4(%arg0: i32, %arg1: i32, %arg2: memref<2x8xi32, #tpu.memory_space<smem>>) -> (i32, i32) {
    %c0_i32 = arith.constant 0 : i32
    %c0_i32_0 = arith.constant 0 : i32
    %c0_i32_1 = arith.constant 0 : i32
    return %c0_i32, %c0_i32_0 : i32, i32
  }
  func.func @transform_5(%arg0: i32, %arg1: i32, %arg2: memref<2x8xi32, #tpu.memory_space<smem>>) -> (i32, i32, i32) {
    %c0_i32 = arith.constant 0 : i32
    %c0_i32_0 = arith.constant 0 : i32
    return %arg0, %arg1, %c0_i32 : i32, i32, i32
  }
  func.func @transform_6(%arg0: i32, %arg1: i32, %arg2: memref<2x8xi32, #tpu.memory_space<smem>>) -> (i32, i32, i32) {
    %c0_i32 = arith.constant 0 : i32
    %c0_i32_0 = arith.constant 0 : i32
    return %arg0, %arg1, %c0_i32 : i32, i32, i32
  }
}

</mosaic_0001>

<llo_original>
// kernel: tpu_custom_call.1
$region0: #{tpu_custom_call.1}
  #allocation0 [shape = 'u32[]', space=smem, size = 0x4, offset = 0x4, fixed_abs, tag = 'smem constant byte address 0x4 - core index']
  #allocation1 [shape = 'u32[144,128]{1,0:T(1,128)}', space=vmem, size = 0x12000, scoped, tag = 'internal scratch']
  #allocation2 [shape = 'f32[8,32]{1,0:T(8,128)}', space=vmem, size = 0x1000, scoped, tag = 'scratch operand']
  #allocation3 [shape = 's32[8]{0}', space=sflag, size = 0x20, scoped, tag = 'scratch operand']
  #allocation4 [shape = 's32[1]{0}', space=sflag, size = 0x4, scoped, tag = 'scoped memory for tpu_custom_call.1']
  #allocation5 [shape = 'u8[1024]{0}', space=smem, size = 0x400, scoped, tag = 'prefetched SMEM operand 0']
  #allocation8 [shape = 's32[]', space=sflag, size = 0x4, offset = 0, fixed_abs, tag = 'sflag constant byte address 0x0 - dummy sync flag']
  #allocation9 [shape = 's32[]', space=sflag, size = 0x4, offset = 0, fixed_abs, tag = 'sflag constant byte address 0x0 - dummy sync flag']
  #allocation10 [shape = 's32[]', space=sflag, size = 0x4, offset = 0, fixed_abs, tag = 'sflag constant byte address 0x0 - dummy sync flag']
  #allocation11 [shape = 's32[]', space=sflag, size = 0x4, offset = 0, fixed_abs, tag = 'sflag constant byte address 0x0 - dummy sync flag']
  #allocation12 [shape = 's32[]', space=sflag, size = 0x4, offset = 0, fixed_abs, tag = 'sflag constant byte address 0x0 - dummy sync flag']
  #allocation13 [shape = 's32[]', space=sflag, size = 0x4, offset = 0, fixed_abs, tag = 'sflag constant byte address 0x0 - dummy sync flag']
  #allocation14 [shape = 's32[]', space=sflag, size = 0x4, offset = 0, fixed_abs, tag = 'sflag constant byte address 0x0 - dummy sync flag']
  #allocation15 [shape = 's32[]', space=sflag, size = 0x4, offset = 0, fixed_abs, tag = 'sflag constant byte address 0x0 - dummy sync flag']
  %s0 = inlined_call_operand.vmem [shape: s32[2,8], index: 0, kind: input, shape index: {}]
  %s1 = inlined_call_operand.vmem [shape: f32[128,32], index: 1, kind: input, shape index: {}]
  %s2 = inlined_call_operand.vmem [shape: f32[2,32], index: 2, kind: input, shape index: {}]
  %s3 = inlined_call_operand.vmem [shape: f32[32,32], index: 3, kind: input, shape index: {}]
  %s4 = inlined_call_operand.vmem [shape: f32[1,32], index: 4, kind: input, shape index: {}]
  %s5 = inlined_call_operand.vmem [shape: f32[1,32], index: 5, kind: input, shape index: {}]
  %s6 = inlined_call_operand.vmem [shape: s32[2,8,1], index: 6, kind: input, shape index: {}]
  %s7 = inlined_call_operand.hbm [shape: f32[2,8,32], index: 7, kind: output, shape index: {}]
  %s8 = sld [smem:[#allocation0]]
  $region293: #{tpu_custom_call.1} parent=0
    _
  %s10 = ssub.s32 1, %s8
  %s11 = scalar_select 0, %s10, %s8
  %s12 = sshll.u32 %s0, 4
  %s13 = int_to_ptr.vmem [resolvable:$true] %s12
  %15 = dma.vmem_to_smem %s13, 32, [#allocation5], [#allocation4]
  %16 = dma.done [#allocation4], 32
  %17 = sfence
  $region1: #{tpu_custom_call.1} parent=0
    #allocation6 [shape = 'u8[8192]{0}', space=vmem, size = 0x2000, scoped, tag = 'output window, operand 0']
    #allocation7 [shape = 's32[2]{0}', space=sflag, size = 0x8, scoped, tag = 'scoped memory for tpu_custom_call.1']
    %18 = vsyncpa [#allocation7], 0
    %s19 = scalar_lea.sflag [#allocation7], 1
    %20 = vsyncpa %s19, 0
    loop: start=0, step=1, limit=4
    $region2: #{tpu_custom_call.1} parent=1 // loop_pre_header
      _
    $region3: #{tpu_custom_call.1} parent=1 // loop_header
      %s22 = sphi 0, %s26
      %p23 = scmp.ge.s32.totalorder %s22, 4
      %s29 = sphi 0, %s41
      %s30 = sphi 0, %s37
      %s31 = sphi 0, %s29
      %s32 = sphi 0, %s30
      %s33 = sphi 0, %s31
      %s34 = sphi 0, %s32
      %s42 = sphi 0, %s42
      %s44 = sphi 0, %s42
      %s45 = sphi 0, %s44
      %s59 = sphi 0, %s45
      %s65 = sphi 0, %s67
      %s68 = sphi 0, %s65
      %s69 = sphi 0, %s68
      %s85 = sphi 0, %s69
      %s89 = sphi 0, %s89
      %s91 = sphi 0, %s89
      %s92 = sphi 0, %s91
      %s106 = sphi 0, %s92
      %s110 = sphi 0, %s110
      %s112 = sphi 0, %s110
      %s113 = sphi 0, %s112
      %s127 = sphi 0, %s113
      %s135 = sphi 0, %s137
      %s138 = sphi 0, %s135
      %s139 = sphi 0, %s138
      %s155 = sphi 0, %s139
      %s163 = sphi 0, %s165
      %s166 = sphi 0, %s163
      %s167 = sphi 0, %s166
      %s183 = sphi 0, %s167
    $region4: #{tpu_custom_call.1} parent=1 // loop_header_branch
      %25 = sbr.rel (%p23) target = $region8
    $region5: #{tpu_custom_call.1} parent=1 // loop_body
      %s27 = ssub.s32 %s22, 1
      %s28 = ssub.s32 %s22, 2
      %s35 = sadd.s32 1, %s30
      %p36 = scmp.ge.s32.totalorder %s35, 1
      %s37 = scalar_select %p36, 0, %s35
      %s38 = sadd.s32 1, %s29
      %s39 = scalar_select %p36, %s38, %s29
      %p40 = scmp.ge.s32.totalorder %s39, 2
      %s41 = scalar_select %p40, 0, %s39
      %s43 = sadd.s32 %s42, 1
      %p46 = scmp.eq.s32.totalorder %s22, 1
      %p47 = scmp.ne.s32.totalorder %s42, %s44
      %p48 = scmp.eq.s32.totalorder %s22, 0
      %p49 = por %p47, %p48
      %p50 = scmp.ne.s32.totalorder %s42, %s44
      %p51 = scmp.eq.s32.totalorder %s27, 1
      %p52 = por %p50, %p51
      %p53 = scmp.ne.s32.totalorder %s44, %s45
      %p54 = scmp.eq.s32.totalorder %s27, 0
      %p55 = por %p53, %p54
      %p56 = scmp.ne.s32.totalorder %s44, %s45
      %p57 = scmp.eq.s32.totalorder %s28, 1
      %p58 = por %p56, %p57
      %p60 = scmp.ne.s32.totalorder %s45, %s59
      %p61 = scmp.eq.s32.totalorder %s28, 0
      %p62 = por %p60, %p61
      %s63 = ssub.s32 %s30, %s37
      %p64 = scmp.eq.s32.totalorder %s63, 0
      %s66 = sadd.s32 %s65, 1
      %s67 = scalar_select %p64, %s65, %s66
      %p70 = pneg %p64
      %p71 = scmp.eq.s32.totalorder %s22, 1
      %p72 = por %p70, %p71
      %p73 = scmp.ne.s32.totalorder %s65, %s68
      %p74 = scmp.eq.s32.totalorder %s22, 0
      %p75 = por %p73, %p74
      %p76 = scmp.ne.s32.totalorder %s65, %s68
      %p77 = scmp.eq.s32.totalorder %s27, 1
      %p78 = por %p76, %p77
      %p79 = scmp.ne.s32.totalorder %s68, %s69
      %p80 = scmp.eq.s32.totalorder %s27, 0
      %p81 = por %p79, %p80
      %p82 = scmp.ne.s32.totalorder %s68, %s69
      %p83 = scmp.eq.s32.totalorder %s28, 1
      %p84 = por %p82, %p83
      %p86 = scmp.ne.s32.totalorder %s69, %s85
      %p87 = scmp.eq.s32.totalorder %s28, 0
      %p88 = por %p86, %p87
      %s90 = sadd.s32 %s89, 1
      %p93 = scmp.eq.s32.totalorder %s22, 1
      %p94 = scmp.ne.s32.totalorder %s89, %s91
      %p95 = scmp.eq.s32.totalorder %s22, 0
      %p96 = por %p94, %p95
      %p97 = scmp.ne.s32.totalorder %s89, %s91
      %p98 = scmp.eq.s32.totalorder %s27, 1
      %p99 = por %p97, %p98
      %p100 = scmp.ne.s32.totalorder %s91, %s92
      %p101 = scmp.eq.s32.totalorder %s27, 0
      %p102 = por %p100, %p101
      %p103 = scmp.ne.s32.totalorder %s91, %s92
      %p104 = scmp.eq.s32.totalorder %s28, 1
      %p105 = por %p103, %p104
      %p107 = scmp.ne.s32.totalorder %s92, %s106
      %p108 = scmp.eq.s32.totalorder %s28, 0
      %p109 = por %p107, %p108
      %s111 = sadd.s32 %s110, 1
      %p114 = scmp.eq.s32.totalorder %s22, 1
      %p115 = scmp.ne.s32.totalorder %s110, %s112
      %p116 = scmp.eq.s32.totalorder %s22, 0
      %p117 = por %p115, %p116
      %p118 = scmp.ne.s32.totalorder %s110, %s112
      %p119 = scmp.eq.s32.totalorder %s27, 1
      %p120 = por %p118, %p119
      %p121 = scmp.ne.s32.totalorder %s112, %s113
      %p122 = scmp.eq.s32.totalorder %s27, 0
      %p123 = por %p121, %p122
      %p124 = scmp.ne.s32.totalorder %s112, %s113
      %p125 = scmp.eq.s32.totalorder %s28, 1
      %p126 = por %p124, %p125
      %p128 = scmp.ne.s32.totalorder %s113, %s127
      %p129 = scmp.eq.s32.totalorder %s28, 0
      %p130 = por %p128, %p129
      %s131 = ssub.s32 %s29, %s41
      %s132 = ssub.s32 %s30, %s37
      %s133 = sor.u32 %s131, %s132
      %p134 = scmp.eq.s32.totalorder %s133, 0
      %s136 = sadd.s32 %s135, 1
      %s137 = scalar_select %p134, %s135, %s136
      %p140 = pneg %p134
      %p141 = scmp.eq.s32.totalorder %s22, 1
      %p142 = por %p140, %p141
      %p143 = scmp.ne.s32.totalorder %s135, %s138
      %p144 = scmp.eq.s32.totalorder %s22, 0
      %p145 = por %p143, %p144
      %p146 = scmp.ne.s32.totalorder %s135, %s138
      %p147 = scmp.eq.s32.totalorder %s27, 1
      %p148 = por %p146, %p147
      %p149 = scmp.ne.s32.totalorder %s138, %s139
      %p150 = scmp.eq.s32.totalorder %s27, 0
      %p151 = por %p149, %p150
      %p152 = scmp.ne.s32.totalorder %s138, %s139
      %p153 = scmp.eq.s32.totalorder %s28, 1
      %p154 = por %p152, %p153
      %p156 = scmp.ne.s32.totalorder %s139, %s155
      %p157 = scmp.eq.s32.totalorder %s28, 0
      %p158 = por %p156, %p157
      %s159 = ssub.s32 %s29, %s41
      %s160 = ssub.s32 %s30, %s37
      %s161 = sor.u32 %s159, %s160
      %p162 = scmp.eq.s32.totalorder %s161, 0
      %s164 = sadd.s32 %s163, 1
      %s165 = scalar_select %p162, %s163, %s164
      %p168 = pneg %p162
      %p169 = scmp.eq.s32.totalorder %s22, 1
      %p170 = por %p168, %p169
      %p171 = scmp.ne.s32.totalorder %s163, %s166
      %p172 = scmp.eq.s32.totalorder %s22, 0
      %p173 = por %p171, %p172
      %p174 = scmp.ne.s32.totalorder %s163, %s166
      %p175 = scmp.eq.s32.totalorder %s27, 1
      %p176 = por %p174, %p175
      %p177 = scmp.ne.s32.totalorder %s166, %s167
      %p178 = scmp.eq.s32.totalorder %s27, 0
      %p179 = por %p177, %p178
      %p180 = scmp.ne.s32.totalorder %s166, %s167
      %p181 = scmp.eq.s32.totalorder %s28, 1
      %p182 = por %p180, %p181
      %p184 = scmp.ne.s32.totalorder %s167, %s183
      %p185 = scmp.eq.s32.totalorder %s28, 0
      %p186 = por %p184, %p185
      %p187 = scmp.le.s32.totalorder 1, %s22
      %p188 = scmp.lt.s32.totalorder %s22, 3
      %p189 = pnand %p187, %p188
      %p190 = pneg %p189
      // Predicated region
      $region9: #{tpu_custom_call.1} parent=5 // pred_check
        _
      $region10: #{tpu_custom_call.1} parent=5 // pred_check_branch
        %192 = sbr.rel (%p189) target = $region12
      $region11: #{tpu_custom_call.1} parent=5 // pred_region
        %s193 = ssub.s32 %s22, 1
        // Predicated region
        $region13: #{tpu_custom_call.1} parent=11 // pred_check
          %p194 = pneg %p55
        $region14: #{tpu_custom_call.1} parent=11 // pred_check_branch
          %196 = sbr.rel (%p194) target = $region16
        $region15: #{tpu_custom_call.1} parent=11 // pred_region
          _
        $region16: #{tpu_custom_call.1} parent=11 // pred_fallthru
          _
        // Predicated region
        $region17: #{tpu_custom_call.1} parent=11 // pred_check
          %p197 = pneg %p81
        $region18: #{tpu_custom_call.1} parent=11 // pred_check_branch
          %199 = sbr.rel (%p197) target = $region20
        $region19: #{tpu_custom_call.1} parent=11 // pred_region
          %p200 = scmp.lt.s32.totalorder %s32, 3
          %s201 = scalar_select %p200, %s32, 3
          %s202 = smul.addr %s201, 8
          %s203 = scalar_lea.vmem %s3, %s202
        $region20: #{tpu_custom_call.1} parent=11 // pred_fallthru
          _
        // Predicated region
        $region21: #{tpu_custom_call.1} parent=11 // pred_check
          %p204 = pneg %p102
        $region22: #{tpu_custom_call.1} parent=11 // pred_check_branch
          %206 = sbr.rel (%p204) target = $region24
        $region23: #{tpu_custom_call.1} parent=11 // pred_region
          _
        $region24: #{tpu_custom_call.1} parent=11 // pred_fallthru
          _
        // Predicated region
        $region25: #{tpu_custom_call.1} parent=11 // pred_check
          %p207 = pneg %p123
        $region26: #{tpu_custom_call.1} parent=11 // pred_check_branch
          %209 = sbr.rel (%p207) target = $region28
        $region27: #{tpu_custom_call.1} parent=11 // pred_region
          _
        $region28: #{tpu_custom_call.1} parent=11 // pred_fallthru
          _
      $region12: #{tpu_custom_call.1} parent=5 // pred_fallthru
        _
      %p210 = scmp.lt.s32.totalorder %s22, 2
      // Predicated region
      $region29: #{tpu_custom_call.1} parent=5 // pred_check
        %p211 = pneg %p210
      $region30: #{tpu_custom_call.1} parent=5 // pred_check_branch
        %213 = sbr.rel (%p211) target = $region32
      $region31: #{tpu_custom_call.1} parent=5 // pred_region
        // Predicated region
        $region33: #{tpu_custom_call.1} parent=31 // pred_check
          %p214 = pneg %p145
        $region34: #{tpu_custom_call.1} parent=31 // pred_check_branch
          %216 = sbr.rel (%p214) target = $region36
        $region35: #{tpu_custom_call.1} parent=31 // pred_region
          %p217 = scmp.lt.s32.totalorder %s29, 1
          %s218 = scalar_select %p217, %s29, 1
          %p219 = scmp.lt.s32.totalorder %s30, 0
          %s220 = scalar_select %p219, %s30, 0
          %s221 = sadd.s32 %s220, %s218
          %s222 = smul.addr %s221, 8
          %s223 = scalar_lea.vmem %s6, %s222
        $region36: #{tpu_custom_call.1} parent=31 // pred_fallthru
          _
      $region32: #{tpu_custom_call.1} parent=5 // pred_fallthru
        _
      %p224 = scmp.le.s32.totalorder 1, %s22
      %p225 = scmp.lt.s32.totalorder %s22, 3
      %p226 = pnand %p224, %p225
      %p227 = pneg %p226
      // Predicated region
      $region37: #{tpu_custom_call.1} parent=5 // pred_check
        _
      $region38: #{tpu_custom_call.1} parent=5 // pred_check_branch
        %229 = sbr.rel (%p226) target = $region40
      $region39: #{tpu_custom_call.1} parent=5 // pred_region
        %s230 = ssub.s32 %s22, 1
        %p231 = pneg %p55
        %p232 = pneg %p52
        %p233 = scmp.lt.s32.totalorder %s32, 3
        %s234 = scalar_select %p233, %s32, 3
        %s235 = smul.addr %s234, 8
        %s236 = scalar_lea.vmem %s3, %s235
        %p237 = pneg %p81
        %p238 = pneg %p78
        %p239 = pneg %p102
        %p240 = pneg %p99
        %p241 = pneg %p123
        %p242 = pneg %p120
        %p243 = scmp.lt.s32.totalorder %s31, 1
        %s244 = scalar_select %p243, %s31, 1
        %p245 = scmp.lt.s32.totalorder %s32, 0
        %s246 = scalar_select %p245, %s32, 0
        %s247 = sadd.s32 %s246, %s244
        %s248 = smul.addr %s247, 8
        %s249 = scalar_lea.vmem %s6, %s248
        %p250 = pneg %p151
        %p251 = pneg %p148
        %p252 = pneg %p179
        %p253 = pneg %p176
        %s254 = sand.u32 %s166, 1
        %s255 = scalar_lea.sflag [#allocation7], %s254
        %s256 = sand.u32 %s166, 1
        %s257 = smul.addr %s256, 8
        %s258 = scalar_lea.vmem [#allocation6], %s257
        %p259 = scmp.lt.s32.totalorder %s32, 3
        %s260 = scalar_select %p259, %s32, 3
        %s261 = smul.addr %s260, 8
        %s262 = scalar_lea.vmem %s3, %s261
        %p263 = scmp.lt.s32.totalorder %s31, 1
        %s264 = scalar_select %p263, %s31, 1
        %p265 = scmp.lt.s32.totalorder %s32, 0
        %s266 = scalar_select %p265, %s32, 0
        %s267 = sadd.s32 %s266, %s264
        %s268 = smul.addr %s267, 8
        %s269 = scalar_lea.vmem %s6, %s268
        %s270 = smul.u32 %s32, 8
        %s271 = sshra.s32 %s270, 7
        %s272 = sand.u32 %s270, 127
        %s273 = sadd.s32 %s271, %s31
        %s274 = smul.u32 %s273, 128
        %s275 = sshra.s32 %s270, 7
        %s276 = sand.u32 %s270, 127
        %s277 = sadd.s32 %s274, %s276
        %s278 = sld [smem:[#allocation5 + %s277]]
        %s279 = scalar_lea.vmem %s1, %s278
        %p281 = scmp.lt.u32.totalorder 1, 8
        %p282 = pneg %p281
        // Predicated region
        $region41: #{tpu_custom_call.1} parent=39 // pred_check
          _
        $region42: #{tpu_custom_call.1} parent=39 // pred_check_branch
          %284 = sbr.rel (%p281) target = $region44
        $region43: #{tpu_custom_call.1} parent=39 // pred_region
          %s299 = sand.u32 1, 7
          %p300 = scmp.eq.s32.totalorder %s299, 0
          %p301 = pneg %p300
          // Predicated region
          $region56: #{tpu_custom_call.1} parent=43 // pred_check
            _
          $region57: #{tpu_custom_call.1} parent=43 // pred_check_branch
            %303 = sbr.rel (%p300) target = $region59
          $region58: #{tpu_custom_call.1} parent=43 // pred_region
            %s304 = sand.u32 1, 7
            %s305 = ssub.s32 1, %s304
            %s306 = scalar_lea.vmem %s279, %s305
            %s307 = ssub.s32 1, %s304
            %s308 = scalar_lea.vmem [#allocation2], %s307
            %s309 = sshllo.u32 0, %s304
            loop: start=0, step=1, limit=1
            $region60: #{tpu_custom_call.1} parent=58 // loop_pre_header
              _
            $region61: #{tpu_custom_call.1} parent=58 // loop_header
              %s311 = sphi 0, %s315
              %p312 = scmp.ge.s32.totalorder %s311, 1
              %s316 = sphi %s306, %s306
              %s317 = sphi %s308, %s308
            $region62: #{tpu_custom_call.1} parent=58 // loop_header_branch
              %314 = sbr.rel (%p312) target = $region66
            $region63: #{tpu_custom_call.1} parent=58 // loop_body
              %v318 = vld [vmem:[%s316] sm:%s309]
              %319 = vst [vmem:[%s317] sm:%s309] %v318
            $region64: #{tpu_custom_call.1} parent=58 // loop_footer
              %s315 = sadd.s32 1, %s311
            $region65: #{tpu_custom_call.1} parent=58 // loop_footer_branch
              %310 = sbr.rel target = $region61
            $region66: #{tpu_custom_call.1} parent=58 // loop_exit
              _
          $region59: #{tpu_custom_call.1} parent=43 // pred_fallthru
            _
        $region44: #{tpu_custom_call.1} parent=39 // pred_fallthru
          _
        // Predicated region
        $region45: #{tpu_custom_call.1} parent=39 // pred_check
          %p285 = pneg %p281
        $region46: #{tpu_custom_call.1} parent=39 // pred_check_branch
          %287 = sbr.rel (%p285) target = $region48
        $region47: #{tpu_custom_call.1} parent=39 // pred_region
          %s288 = sshllo.u32 0, 1
          loop: start=0, step=1, limit=1
          $region49: #{tpu_custom_call.1} parent=47 // loop_pre_header
            _
          $region50: #{tpu_custom_call.1} parent=47 // loop_header
            %s290 = sphi 0, %s294
            %p291 = scmp.ge.s32.totalorder %s290, 1
            %s295 = sphi %s279, %s279
            %s296 = sphi [#allocation2], [#allocation2]
          $region51: #{tpu_custom_call.1} parent=47 // loop_header_branch
            %293 = sbr.rel (%p291) target = $region55
          $region52: #{tpu_custom_call.1} parent=47 // loop_body
            %v297 = vld [vmem:[%s295] sm:%s288]
            %298 = vst [vmem:[%s296] sm:%s288] %v297
          $region53: #{tpu_custom_call.1} parent=47 // loop_footer
            %s294 = sadd.s32 1, %s290
          $region54: #{tpu_custom_call.1} parent=47 // loop_footer_branch
            %289 = sbr.rel target = $region50
          $region55: #{tpu_custom_call.1} parent=47 // loop_exit
            _
        $region48: #{tpu_custom_call.1} parent=39 // pred_fallthru
          _
        // Predicated region
        $region67: #{tpu_custom_call.1} parent=39 // pred_check
          _
        $region68: #{tpu_custom_call.1} parent=39 // pred_check_branch
          %322 = sbr.rel (0) target = $region70
        $region69: #{tpu_custom_call.1} parent=39 // pred_region
          %323 = vsyncadd [#allocation3], 16
        $region70: #{tpu_custom_call.1} parent=39 // pred_fallthru
          _
        %s324 = sadd.s32 %s270, 1
        %s325 = sshra.s32 %s324, 7
        %s326 = sand.u32 %s324, 127
        %s327 = sadd.s32 %s325, %s31
        %s328 = smul.u32 %s327, 128
        %s329 = sshra.s32 %s324, 7
        %s330 = sand.u32 %s324, 127
        %s331 = sadd.s32 %s328, %s330
        %s332 = sld [smem:[#allocation5 + %s331]]
        %s333 = scalar_lea.vmem %s1, %s332
        %s334 = scalar_lea.vmem [#allocation2], 1
        %s335 = scalar_lea.sflag [#allocation3], 1
        %p337 = scmp.lt.u32.totalorder 1, 8
        %p338 = pneg %p337
        // Predicated region
        $region71: #{tpu_custom_call.1} parent=39 // pred_check
          _
        $region72: #{tpu_custom_call.1} parent=39 // pred_check_branch
          %340 = sbr.rel (%p337) target = $region74
        $region73: #{tpu_custom_call.1} parent=39 // pred_region
          %s355 = sand.u32 1, 7
          %p356 = scmp.eq.s32.totalorder %s355, 0
          %p357 = pneg %p356
          // Predicated region
          $region86: #{tpu_custom_call.1} parent=73 // pred_check
            _
          $region87: #{tpu_custom_call.1} parent=73 // pred_check_branch
            %359 = sbr.rel (%p356) target = $region89
          $region88: #{tpu_custom_call.1} parent=73 // pred_region
            %s360 = sand.u32 1, 7
            %s361 = ssub.s32 1, %s360
            %s362 = scalar_lea.vmem %s333, %s361
            %s363 = ssub.s32 1, %s360
            %s364 = scalar_lea.vmem %s334, %s363 [#allocation2]
            %s365 = sshllo.u32 0, %s360
            loop: start=0, step=1, limit=1
            $region90: #{tpu_custom_call.1} parent=88 // loop_pre_header
              _
            $region91: #{tpu_custom_call.1} parent=88 // loop_header
              %s367 = sphi 0, %s371
              %p368 = scmp.ge.s32.totalorder %s367, 1
              %s372 = sphi %s362, %s362
              %s373 = sphi %s364, %s364
            $region92: #{tpu_custom_call.1} parent=88 // loop_header_branch
              %370 = sbr.rel (%p368) target = $region96
            $region93: #{tpu_custom_call.1} parent=88 // loop_body
              %v374 = vld [vmem:[%s372] sm:%s365]
              %375 = vst [vmem:[%s373] sm:%s365] %v374
            $region94: #{tpu_custom_call.1} parent=88 // loop_footer
              %s371 = sadd.s32 1, %s367
            $region95: #{tpu_custom_call.1} parent=88 // loop_footer_branch
              %366 = sbr.rel target = $region91
            $region96: #{tpu_custom_call.1} parent=88 // loop_exit
              _
          $region89: #{tpu_custom_call.1} parent=73 // pred_fallthru
            _
        $region74: #{tpu_custom_call.1} parent=39 // pred_fallthru
          _
        // Predicated region
        $region75: #{tpu_custom_call.1} parent=39 // pred_check
          %p341 = pneg %p337
        $region76: #{tpu_custom_call.1} parent=39 // pred_check_branch
          %343 = sbr.rel (%p341) target = $region78
        $region77: #{tpu_custom_call.1} parent=39 // pred_region
          %s344 = sshllo.u32 0, 1
          loop: start=0, step=1, limit=1
          $region79: #{tpu_custom_call.1} parent=77 // loop_pre_header
            _
          $region80: #{tpu_custom_call.1} parent=77 // loop_header
            %s346 = sphi 0, %s350
            %p347 = scmp.ge.s32.totalorder %s346, 1
            %s351 = sphi %s333, %s333
            %s352 = sphi %s334, %s334
          $region81: #{tpu_custom_call.1} parent=77 // loop_header_branch
            %349 = sbr.rel (%p347) target = $region85
          $region82: #{tpu_custom_call.1} parent=77 // loop_body
            %v353 = vld [vmem:[%s351] sm:%s344]
            %354 = vst [vmem:[%s352] sm:%s344] %v353
          $region83: #{tpu_custom_call.1} parent=77 // loop_footer
            %s350 = sadd.s32 1, %s346
          $region84: #{tpu_custom_call.1} parent=77 // loop_footer_branch
            %345 = sbr.rel target = $region80
          $region85: #{tpu_custom_call.1} parent=77 // loop_exit
            _
        $region78: #{tpu_custom_call.1} parent=39 // pred_fallthru
          _
        // Predicated region
        $region97: #{tpu_custom_call.1} parent=39 // pred_check
          _
        $region98: #{tpu_custom_call.1} parent=39 // pred_check_branch
          %378 = sbr.rel (0) target = $region100
        $region99: #{tpu_custom_call.1} parent=39 // pred_region
          %379 = vsyncadd %s335, 16
        $region100: #{tpu_custom_call.1} parent=39 // pred_fallthru
          _
        %s380 = sadd.s32 %s270, 2
        %s381 = sshra.s32 %s380, 7
        %s382 = sand.u32 %s380, 127
        %s383 = sadd.s32 %s381, %s31
        %s384 = smul.u32 %s383, 128
        %s385 = sshra.s32 %s380, 7
        %s386 = sand.u32 %s380, 127
        %s387 = sadd.s32 %s384, %s386
        %s388 = sld [smem:[#allocation5 + %s387]]
        %s389 = scalar_lea.vmem %s1, %s388
        %s390 = scalar_lea.vmem [#allocation2], 2
        %s391 = scalar_lea.sflag [#allocation3], 2
        %p393 = scmp.lt.u32.totalorder 1, 8
        %p394 = pneg %p393
        // Predicated region
        $region101: #{tpu_custom_call.1} parent=39 // pred_check
          _
        $region102: #{tpu_custom_call.1} parent=39 // pred_check_branch
          %396 = sbr.rel (%p393) target = $region104
        $region103: #{tpu_custom_call.1} parent=39 // pred_region
          %s411 = sand.u32 1, 7
          %p412 = scmp.eq.s32.totalorder %s411, 0
          %p413 = pneg %p412
          // Predicated region
          $region116: #{tpu_custom_call.1} parent=103 // pred_check
            _
          $region117: #{tpu_custom_call.1} parent=103 // pred_check_branch
            %415 = sbr.rel (%p412) target = $region119
          $region118: #{tpu_custom_call.1} parent=103 // pred_region
            %s416 = sand.u32 1, 7
            %s417 = ssub.s32 1, %s416
            %s418 = scalar_lea.vmem %s389, %s417
            %s419 = ssub.s32 1, %s416
            %s420 = scalar_lea.vmem %s390, %s419 [#allocation2]
            %s421 = sshllo.u32 0, %s416
            loop: start=0, step=1, limit=1
            $region120: #{tpu_custom_call.1} parent=118 // loop_pre_header
              _
            $region121: #{tpu_custom_call.1} parent=118 // loop_header
              %s423 = sphi 0, %s427
              %p424 = scmp.ge.s32.totalorder %s423, 1
              %s428 = sphi %s418, %s418
              %s429 = sphi %s420, %s420
            $region122: #{tpu_custom_call.1} parent=118 // loop_header_branch
              %426 = sbr.rel (%p424) target = $region126
            $region123: #{tpu_custom_call.1} parent=118 // loop_body
              %v430 = vld [vmem:[%s428] sm:%s421]
              %431 = vst [vmem:[%s429] sm:%s421] %v430
            $region124: #{tpu_custom_call.1} parent=118 // loop_footer
              %s427 = sadd.s32 1, %s423
            $region125: #{tpu_custom_call.1} parent=118 // loop_footer_branch
              %422 = sbr.rel target = $region121
            $region126: #{tpu_custom_call.1} parent=118 // loop_exit
              _
          $region119: #{tpu_custom_call.1} parent=103 // pred_fallthru
            _
        $region104: #{tpu_custom_call.1} parent=39 // pred_fallthru
          _
        // Predicated region
        $region105: #{tpu_custom_call.1} parent=39 // pred_check
          %p397 = pneg %p393
        $region106: #{tpu_custom_call.1} parent=39 // pred_check_branch
          %399 = sbr.rel (%p397) target = $region108
        $region107: #{tpu_custom_call.1} parent=39 // pred_region
          %s400 = sshllo.u32 0, 1
          loop: start=0, step=1, limit=1
          $region109: #{tpu_custom_call.1} parent=107 // loop_pre_header
            _
          $region110: #{tpu_custom_call.1} parent=107 // loop_header
            %s402 = sphi 0, %s406
            %p403 = scmp.ge.s32.totalorder %s402, 1
            %s407 = sphi %s389, %s389
            %s408 = sphi %s390, %s390
          $region111: #{tpu_custom_call.1} parent=107 // loop_header_branch
            %405 = sbr.rel (%p403) target = $region115
          $region112: #{tpu_custom_call.1} parent=107 // loop_body
            %v409 = vld [vmem:[%s407] sm:%s400]
            %410 = vst [vmem:[%s408] sm:%s400] %v409
          $region113: #{tpu_custom_call.1} parent=107 // loop_footer
            %s406 = sadd.s32 1, %s402
          $region114: #{tpu_custom_call.1} parent=107 // loop_footer_branch
            %401 = sbr.rel target = $region110
          $region115: #{tpu_custom_call.1} parent=107 // loop_exit
            _
        $region108: #{tpu_custom_call.1} parent=39 // pred_fallthru
          _
        // Predicated region
        $region127: #{tpu_custom_call.1} parent=39 // pred_check
          _
        $region128: #{tpu_custom_call.1} parent=39 // pred_check_branch
          %434 = sbr.rel (0) target = $region130
        $region129: #{tpu_custom_call.1} parent=39 // pred_region
          %435 = vsyncadd %s391, 16
        $region130: #{tpu_custom_call.1} parent=39 // pred_fallthru
          _
        %s436 = sadd.s32 %s270, 3
        %s437 = sshra.s32 %s436, 7
        %s438 = sand.u32 %s436, 127
        %s439 = sadd.s32 %s437, %s31
        %s440 = smul.u32 %s439, 128
        %s441 = sshra.s32 %s436, 7
        %s442 = sand.u32 %s436, 127
        %s443 = sadd.s32 %s440, %s442
        %s444 = sld [smem:[#allocation5 + %s443]]
        %s445 = scalar_lea.vmem %s1, %s444
        %s446 = scalar_lea.vmem [#allocation2], 3
        %s447 = scalar_lea.sflag [#allocation3], 3
        %p449 = scmp.lt.u32.totalorder 1, 8
        %p450 = pneg %p449
        // Predicated region
        $region131: #{tpu_custom_call.1} parent=39 // pred_check
          _
        $region132: #{tpu_custom_call.1} parent=39 // pred_check_branch
          %452 = sbr.rel (%p449) target = $region134
        $region133: #{tpu_custom_call.1} parent=39 // pred_region
          %s467 = sand.u32 1, 7
          %p468 = scmp.eq.s32.totalorder %s467, 0
          %p469 = pneg %p468
          // Predicated region
          $region146: #{tpu_custom_call.1} parent=133 // pred_check
            _
          $region147: #{tpu_custom_call.1} parent=133 // pred_check_branch
            %471 = sbr.rel (%p468) target = $region149
          $region148: #{tpu_custom_call.1} parent=133 // pred_region
            %s472 = sand.u32 1, 7
            %s473 = ssub.s32 1, %s472
            %s474 = scalar_lea.vmem %s445, %s473
            %s475 = ssub.s32 1, %s472
            %s476 = scalar_lea.vmem %s446, %s475 [#allocation2]
            %s477 = sshllo.u32 0, %s472
            loop: start=0, step=1, limit=1
            $region150: #{tpu_custom_call.1} parent=148 // loop_pre_header
              _
            $region151: #{tpu_custom_call.1} parent=148 // loop_header
              %s479 = sphi 0, %s483
              %p480 = scmp.ge.s32.totalorder %s479, 1
              %s484 = sphi %s474, %s474
              %s485 = sphi %s476, %s476
            $region152: #{tpu_custom_call.1} parent=148 // loop_header_branch
              %482 = sbr.rel (%p480) target = $region156
            $region153: #{tpu_custom_call.1} parent=148 // loop_body
              %v486 = vld [vmem:[%s484] sm:%s477]
              %487 = vst [vmem:[%s485] sm:%s477] %v486
            $region154: #{tpu_custom_call.1} parent=148 // loop_footer
              %s483 = sadd.s32 1, %s479
            $region155: #{tpu_custom_call.1} parent=148 // loop_footer_branch
              %478 = sbr.rel target = $region151
            $region156: #{tpu_custom_call.1} parent=148 // loop_exit
              _
          $region149: #{tpu_custom_call.1} parent=133 // pred_fallthru
            _
        $region134: #{tpu_custom_call.1} parent=39 // pred_fallthru
          _
        // Predicated region
        $region135: #{tpu_custom_call.1} parent=39 // pred_check
          %p453 = pneg %p449
        $region136: #{tpu_custom_call.1} parent=39 // pred_check_branch
          %455 = sbr.rel (%p453) target = $region138
        $region137: #{tpu_custom_call.1} parent=39 // pred_region
          %s456 = sshllo.u32 0, 1
          loop: start=0, step=1, limit=1
          $region139: #{tpu_custom_call.1} parent=137 // loop_pre_header
            _
          $region140: #{tpu_custom_call.1} parent=137 // loop_header
            %s458 = sphi 0, %s462
            %p459 = scmp.ge.s32.totalorder %s458, 1
            %s463 = sphi %s445, %s445
            %s464 = sphi %s446, %s446
          $region141: #{tpu_custom_call.1} parent=137 // loop_header_branch
            %461 = sbr.rel (%p459) target = $region145
          $region142: #{tpu_custom_call.1} parent=137 // loop_body
            %v465 = vld [vmem:[%s463] sm:%s456]
            %466 = vst [vmem:[%s464] sm:%s456] %v465
          $region143: #{tpu_custom_call.1} parent=137 // loop_footer
            %s462 = sadd.s32 1, %s458
          $region144: #{tpu_custom_call.1} parent=137 // loop_footer_branch
            %457 = sbr.rel target = $region140
          $region145: #{tpu_custom_call.1} parent=137 // loop_exit
            _
        $region138: #{tpu_custom_call.1} parent=39 // pred_fallthru
          _
        // Predicated region
        $region157: #{tpu_custom_call.1} parent=39 // pred_check
          _
        $region158: #{tpu_custom_call.1} parent=39 // pred_check_branch
          %490 = sbr.rel (0) target = $region160
        $region159: #{tpu_custom_call.1} parent=39 // pred_region
          %491 = vsyncadd %s447, 16
        $region160: #{tpu_custom_call.1} parent=39 // pred_fallthru
          _
        %s492 = sadd.s32 %s270, 4
        %s493 = sshra.s32 %s492, 7
        %s494 = sand.u32 %s492, 127
        %s495 = sadd.s32 %s493, %s31
        %s496 = smul.u32 %s495, 128
        %s497 = sshra.s32 %s492, 7
        %s498 = sand.u32 %s492, 127
        %s499 = sadd.s32 %s496, %s498
        %s500 = sld [smem:[#allocation5 + %s499]]
        %s501 = scalar_lea.vmem %s1, %s500
        %s502 = scalar_lea.vmem [#allocation2], 4
        %s503 = scalar_lea.sflag [#allocation3], 4
        %p505 = scmp.lt.u32.totalorder 1, 8
        %p506 = pneg %p505
        // Predicated region
        $region161: #{tpu_custom_call.1} parent=39 // pred_check
          _
        $region162: #{tpu_custom_call.1} parent=39 // pred_check_branch
          %508 = sbr.rel (%p505) target = $region164
        $region163: #{tpu_custom_call.1} parent=39 // pred_region
          %s523 = sand.u32 1, 7
          %p524 = scmp.eq.s32.totalorder %s523, 0
          %p525 = pneg %p524
          // Predicated region
          $region176: #{tpu_custom_call.1} parent=163 // pred_check
            _
          $region177: #{tpu_custom_call.1} parent=163 // pred_check_branch
            %527 = sbr.rel (%p524) target = $region179
          $region178: #{tpu_custom_call.1} parent=163 // pred_region
            %s528 = sand.u32 1, 7
            %s529 = ssub.s32 1, %s528
            %s530 = scalar_lea.vmem %s501, %s529
            %s531 = ssub.s32 1, %s528
            %s532 = scalar_lea.vmem %s502, %s531 [#allocation2]
            %s533 = sshllo.u32 0, %s528
            loop: start=0, step=1, limit=1
            $region180: #{tpu_custom_call.1} parent=178 // loop_pre_header
              _
            $region181: #{tpu_custom_call.1} parent=178 // loop_header
              %s535 = sphi 0, %s539
              %p536 = scmp.ge.s32.totalorder %s535, 1
              %s540 = sphi %s530, %s530
              %s541 = sphi %s532, %s532
            $region182: #{tpu_custom_call.1} parent=178 // loop_header_branch
              %538 = sbr.rel (%p536) target = $region186
            $region183: #{tpu_custom_call.1} parent=178 // loop_body
              %v542 = vld [vmem:[%s540] sm:%s533]
              %543 = vst [vmem:[%s541] sm:%s533] %v542
            $region184: #{tpu_custom_call.1} parent=178 // loop_footer
              %s539 = sadd.s32 1, %s535
            $region185: #{tpu_custom_call.1} parent=178 // loop_footer_branch
              %534 = sbr.rel target = $region181
            $region186: #{tpu_custom_call.1} parent=178 // loop_exit
              _
          $region179: #{tpu_custom_call.1} parent=163 // pred_fallthru
            _
        $region164: #{tpu_custom_call.1} parent=39 // pred_fallthru
          _
        // Predicated region
        $region165: #{tpu_custom_call.1} parent=39 // pred_check
          %p509 = pneg %p505
        $region166: #{tpu_custom_call.1} parent=39 // pred_check_branch
          %511 = sbr.rel (%p509) target = $region168
        $region167: #{tpu_custom_call.1} parent=39 // pred_region
          %s512 = sshllo.u32 0, 1
          loop: start=0, step=1, limit=1
          $region169: #{tpu_custom_call.1} parent=167 // loop_pre_header
            _
          $region170: #{tpu_custom_call.1} parent=167 // loop_header
            %s514 = sphi 0, %s518
            %p515 = scmp.ge.s32.totalorder %s514, 1
            %s519 = sphi %s501, %s501
            %s520 = sphi %s502, %s502
          $region171: #{tpu_custom_call.1} parent=167 // loop_header_branch
            %517 = sbr.rel (%p515) target = $region175
          $region172: #{tpu_custom_call.1} parent=167 // loop_body
            %v521 = vld [vmem:[%s519] sm:%s512]
            %522 = vst [vmem:[%s520] sm:%s512] %v521
          $region173: #{tpu_custom_call.1} parent=167 // loop_footer
            %s518 = sadd.s32 1, %s514
          $region174: #{tpu_custom_call.1} parent=167 // loop_footer_branch
            %513 = sbr.rel target = $region170
          $region175: #{tpu_custom_call.1} parent=167 // loop_exit
            _
        $region168: #{tpu_custom_call.1} parent=39 // pred_fallthru
          _
        // Predicated region
        $region187: #{tpu_custom_call.1} parent=39 // pred_check
          _
        $region188: #{tpu_custom_call.1} parent=39 // pred_check_branch
          %546 = sbr.rel (0) target = $region190
        $region189: #{tpu_custom_call.1} parent=39 // pred_region
          %547 = vsyncadd %s503, 16
        $region190: #{tpu_custom_call.1} parent=39 // pred_fallthru
          _
        %s548 = sadd.s32 %s270, 5
        %s549 = sshra.s32 %s548, 7
        %s550 = sand.u32 %s548, 127
        %s551 = sadd.s32 %s549, %s31
        %s552 = smul.u32 %s551, 128
        %s553 = sshra.s32 %s548, 7
        %s554 = sand.u32 %s548, 127
        %s555 = sadd.s32 %s552, %s554
        %s556 = sld [smem:[#allocation5 + %s555]]
        %s557 = scalar_lea.vmem %s1, %s556
        %s558 = scalar_lea.vmem [#allocation2], 5
        %s559 = scalar_lea.sflag [#allocation3], 5
        %p561 = scmp.lt.u32.totalorder 1, 8
        %p562 = pneg %p561
        // Predicated region
        $region191: #{tpu_custom_call.1} parent=39 // pred_check
          _
        $region192: #{tpu_custom_call.1} parent=39 // pred_check_branch
          %564 = sbr.rel (%p561) target = $region194
        $region193: #{tpu_custom_call.1} parent=39 // pred_region
          %s579 = sand.u32 1, 7
          %p580 = scmp.eq.s32.totalorder %s579, 0
          %p581 = pneg %p580
          // Predicated region
          $region206: #{tpu_custom_call.1} parent=193 // pred_check
            _
          $region207: #{tpu_custom_call.1} parent=193 // pred_check_branch
            %583 = sbr.rel (%p580) target = $region209
          $region208: #{tpu_custom_call.1} parent=193 // pred_region
            %s584 = sand.u32 1, 7
            %s585 = ssub.s32 1, %s584
            %s586 = scalar_lea.vmem %s557, %s585
            %s587 = ssub.s32 1, %s584
            %s588 = scalar_lea.vmem %s558, %s587 [#allocation2]
            %s589 = sshllo.u32 0, %s584
            loop: start=0, step=1, limit=1
            $region210: #{tpu_custom_call.1} parent=208 // loop_pre_header
              _
            $region211: #{tpu_custom_call.1} parent=208 // loop_header
              %s591 = sphi 0, %s595
              %p592 = scmp.ge.s32.totalorder %s591, 1
              %s596 = sphi %s586, %s586
              %s597 = sphi %s588, %s588
            $region212: #{tpu_custom_call.1} parent=208 // loop_header_branch
              %594 = sbr.rel (%p592) target = $region216
            $region213: #{tpu_custom_call.1} parent=208 // loop_body
              %v598 = vld [vmem:[%s596] sm:%s589]
              %599 = vst [vmem:[%s597] sm:%s589] %v598
            $region214: #{tpu_custom_call.1} parent=208 // loop_footer
              %s595 = sadd.s32 1, %s591
            $region215: #{tpu_custom_call.1} parent=208 // loop_footer_branch
              %590 = sbr.rel target = $region211
            $region216: #{tpu_custom_call.1} parent=208 // loop_exit
              _
          $region209: #{tpu_custom_call.1} parent=193 // pred_fallthru
            _
        $region194: #{tpu_custom_call.1} parent=39 // pred_fallthru
          _
        // Predicated region
        $region195: #{tpu_custom_call.1} parent=39 // pred_check
          %p565 = pneg %p561
        $region196: #{tpu_custom_call.1} parent=39 // pred_check_branch
          %567 = sbr.rel (%p565) target = $region198
        $region197: #{tpu_custom_call.1} parent=39 // pred_region
          %s568 = sshllo.u32 0, 1
          loop: start=0, step=1, limit=1
          $region199: #{tpu_custom_call.1} parent=197 // loop_pre_header
            _
          $region200: #{tpu_custom_call.1} parent=197 // loop_header
            %s570 = sphi 0, %s574
            %p571 = scmp.ge.s32.totalorder %s570, 1
            %s575 = sphi %s557, %s557
            %s576 = sphi %s558, %s558
          $region201: #{tpu_custom_call.1} parent=197 // loop_header_branch
            %573 = sbr.rel (%p571) target = $region205
          $region202: #{tpu_custom_call.1} parent=197 // loop_body
            %v577 = vld [vmem:[%s575] sm:%s568]
            %578 = vst [vmem:[%s576] sm:%s568] %v577
          $region203: #{tpu_custom_call.1} parent=197 // loop_footer
            %s574 = sadd.s32 1, %s570
          $region204: #{tpu_custom_call.1} parent=197 // loop_footer_branch
            %569 = sbr.rel target = $region200
          $region205: #{tpu_custom_call.1} parent=197 // loop_exit
            _
        $region198: #{tpu_custom_call.1} parent=39 // pred_fallthru
          _
        // Predicated region
        $region217: #{tpu_custom_call.1} parent=39 // pred_check
          _
        $region218: #{tpu_custom_call.1} parent=39 // pred_check_branch
          %602 = sbr.rel (0) target = $region220
        $region219: #{tpu_custom_call.1} parent=39 // pred_region
          %603 = vsyncadd %s559, 16
        $region220: #{tpu_custom_call.1} parent=39 // pred_fallthru
          _
        %s604 = sadd.s32 %s270, 6
        %s605 = sshra.s32 %s604, 7
        %s606 = sand.u32 %s604, 127
        %s607 = sadd.s32 %s605, %s31
        %s608 = smul.u32 %s607, 128
        %s609 = sshra.s32 %s604, 7
        %s610 = sand.u32 %s604, 127
        %s611 = sadd.s32 %s608, %s610
        %s612 = sld [smem:[#allocation5 + %s611]]
        %s613 = scalar_lea.vmem %s1, %s612
        %s614 = scalar_lea.vmem [#allocation2], 6
        %s615 = scalar_lea.sflag [#allocation3], 6
        %p617 = scmp.lt.u32.totalorder 1, 8
        %p618 = pneg %p617
        // Predicated region
        $region221: #{tpu_custom_call.1} parent=39 // pred_check
          _
        $region222: #{tpu_custom_call.1} parent=39 // pred_check_branch
          %620 = sbr.rel (%p617) target = $region224
        $region223: #{tpu_custom_call.1} parent=39 // pred_region
          %s635 = sand.u32 1, 7
          %p636 = scmp.eq.s32.totalorder %s635, 0
          %p637 = pneg %p636
          // Predicated region
          $region236: #{tpu_custom_call.1} parent=223 // pred_check
            _
          $region237: #{tpu_custom_call.1} parent=223 // pred_check_branch
            %639 = sbr.rel (%p636) target = $region239
          $region238: #{tpu_custom_call.1} parent=223 // pred_region
            %s640 = sand.u32 1, 7
            %s641 = ssub.s32 1, %s640
            %s642 = scalar_lea.vmem %s613, %s641
            %s643 = ssub.s32 1, %s640
            %s644 = scalar_lea.vmem %s614, %s643 [#allocation2]
            %s645 = sshllo.u32 0, %s640
            loop: start=0, step=1, limit=1
            $region240: #{tpu_custom_call.1} parent=238 // loop_pre_header
              _
            $region241: #{tpu_custom_call.1} parent=238 // loop_header
              %s647 = sphi 0, %s651
              %p648 = scmp.ge.s32.totalorder %s647, 1
              %s652 = sphi %s642, %s642
              %s653 = sphi %s644, %s644
            $region242: #{tpu_custom_call.1} parent=238 // loop_header_branch
              %650 = sbr.rel (%p648) target = $region246
            $region243: #{tpu_custom_call.1} parent=238 // loop_body
              %v654 = vld [vmem:[%s652] sm:%s645]
              %655 = vst [vmem:[%s653] sm:%s645] %v654
            $region244: #{tpu_custom_call.1} parent=238 // loop_footer
              %s651 = sadd.s32 1, %s647
            $region245: #{tpu_custom_call.1} parent=238 // loop_footer_branch
              %646 = sbr.rel target = $region241
            $region246: #{tpu_custom_call.1} parent=238 // loop_exit
              _
          $region239: #{tpu_custom_call.1} parent=223 // pred_fallthru
            _
        $region224: #{tpu_custom_call.1} parent=39 // pred_fallthru
          _
        // Predicated region
        $region225: #{tpu_custom_call.1} parent=39 // pred_check
          %p621 = pneg %p617
        $region226: #{tpu_custom_call.1} parent=39 // pred_check_branch
          %623 = sbr.rel (%p621) target = $region228
        $region227: #{tpu_custom_call.1} parent=39 // pred_region
          %s624 = sshllo.u32 0, 1
          loop: start=0, step=1, limit=1
          $region229: #{tpu_custom_call.1} parent=227 // loop_pre_header
            _
          $region230: #{tpu_custom_call.1} parent=227 // loop_header
            %s626 = sphi 0, %s630
            %p627 = scmp.ge.s32.totalorder %s626, 1
            %s631 = sphi %s613, %s613
            %s632 = sphi %s614, %s614
          $region231: #{tpu_custom_call.1} parent=227 // loop_header_branch
            %629 = sbr.rel (%p627) target = $region235
          $region232: #{tpu_custom_call.1} parent=227 // loop_body
            %v633 = vld [vmem:[%s631] sm:%s624]
            %634 = vst [vmem:[%s632] sm:%s624] %v633
          $region233: #{tpu_custom_call.1} parent=227 // loop_footer
            %s630 = sadd.s32 1, %s626
          $region234: #{tpu_custom_call.1} parent=227 // loop_footer_branch
            %625 = sbr.rel target = $region230
          $region235: #{tpu_custom_call.1} parent=227 // loop_exit
            _
        $region228: #{tpu_custom_call.1} parent=39 // pred_fallthru
          _
        // Predicated region
        $region247: #{tpu_custom_call.1} parent=39 // pred_check
          _
        $region248: #{tpu_custom_call.1} parent=39 // pred_check_branch
          %658 = sbr.rel (0) target = $region250
        $region249: #{tpu_custom_call.1} parent=39 // pred_region
          %659 = vsyncadd %s615, 16
        $region250: #{tpu_custom_call.1} parent=39 // pred_fallthru
          _
        %s660 = sadd.s32 %s270, 7
        %s661 = sshra.s32 %s660, 7
        %s662 = sand.u32 %s660, 127
        %s663 = sadd.s32 %s661, %s31
        %s664 = smul.u32 %s663, 128
        %s665 = sshra.s32 %s660, 7
        %s666 = sand.u32 %s660, 127
        %s667 = sadd.s32 %s664, %s666
        %s668 = sld [smem:[#allocation5 + %s667]]
        %s669 = scalar_lea.vmem %s1, %s668
        %s670 = scalar_lea.vmem [#allocation2], 7
        %s671 = scalar_lea.sflag [#allocation3], 7
        %p673 = scmp.lt.u32.totalorder 1, 8
        %p674 = pneg %p673
        // Predicated region
        $region251: #{tpu_custom_call.1} parent=39 // pred_check
          _
        $region252: #{tpu_custom_call.1} parent=39 // pred_check_branch
          %676 = sbr.rel (%p673) target = $region254
        $region253: #{tpu_custom_call.1} parent=39 // pred_region
          %s691 = sand.u32 1, 7
          %p692 = scmp.eq.s32.totalorder %s691, 0
          %p693 = pneg %p692
          // Predicated region
          $region266: #{tpu_custom_call.1} parent=253 // pred_check
            _
          $region267: #{tpu_custom_call.1} parent=253 // pred_check_branch
            %695 = sbr.rel (%p692) target = $region269
          $region268: #{tpu_custom_call.1} parent=253 // pred_region
            %s696 = sand.u32 1, 7
            %s697 = ssub.s32 1, %s696
            %s698 = scalar_lea.vmem %s669, %s697
            %s699 = ssub.s32 1, %s696
            %s700 = scalar_lea.vmem %s670, %s699 [#allocation2]
            %s701 = sshllo.u32 0, %s696
            loop: start=0, step=1, limit=1
            $region270: #{tpu_custom_call.1} parent=268 // loop_pre_header
              _
            $region271: #{tpu_custom_call.1} parent=268 // loop_header
              %s703 = sphi 0, %s707
              %p704 = scmp.ge.s32.totalorder %s703, 1
              %s708 = sphi %s698, %s698
              %s709 = sphi %s700, %s700
            $region272: #{tpu_custom_call.1} parent=268 // loop_header_branch
              %706 = sbr.rel (%p704) target = $region276
            $region273: #{tpu_custom_call.1} parent=268 // loop_body
              %v710 = vld [vmem:[%s708] sm:%s701]
              %711 = vst [vmem:[%s709] sm:%s701] %v710
            $region274: #{tpu_custom_call.1} parent=268 // loop_footer
              %s707 = sadd.s32 1, %s703
            $region275: #{tpu_custom_call.1} parent=268 // loop_footer_branch
              %702 = sbr.rel target = $region271
            $region276: #{tpu_custom_call.1} parent=268 // loop_exit
              _
          $region269: #{tpu_custom_call.1} parent=253 // pred_fallthru
            _
        $region254: #{tpu_custom_call.1} parent=39 // pred_fallthru
          _
        // Predicated region
        $region255: #{tpu_custom_call.1} parent=39 // pred_check
          %p677 = pneg %p673
        $region256: #{tpu_custom_call.1} parent=39 // pred_check_branch
          %679 = sbr.rel (%p677) target = $region258
        $region257: #{tpu_custom_call.1} parent=39 // pred_region
          %s680 = sshllo.u32 0, 1
          loop: start=0, step=1, limit=1
          $region259: #{tpu_custom_call.1} parent=257 // loop_pre_header
            _
          $region260: #{tpu_custom_call.1} parent=257 // loop_header
            %s682 = sphi 0, %s686
            %p683 = scmp.ge.s32.totalorder %s682, 1
            %s687 = sphi %s669, %s669
            %s688 = sphi %s670, %s670
          $region261: #{tpu_custom_call.1} parent=257 // loop_header_branch
            %685 = sbr.rel (%p683) target = $region265
          $region262: #{tpu_custom_call.1} parent=257 // loop_body
            %v689 = vld [vmem:[%s687] sm:%s680]
            %690 = vst [vmem:[%s688] sm:%s680] %v689
          $region263: #{tpu_custom_call.1} parent=257 // loop_footer
            %s686 = sadd.s32 1, %s682
          $region264: #{tpu_custom_call.1} parent=257 // loop_footer_branch
            %681 = sbr.rel target = $region260
          $region265: #{tpu_custom_call.1} parent=257 // loop_exit
            _
        $region258: #{tpu_custom_call.1} parent=39 // pred_fallthru
          _
        // Predicated region
        $region277: #{tpu_custom_call.1} parent=39 // pred_check
          _
        $region278: #{tpu_custom_call.1} parent=39 // pred_check_branch
          %714 = sbr.rel (0) target = $region280
        $region279: #{tpu_custom_call.1} parent=39 // pred_region
          %715 = vsyncadd %s671, 16
        $region280: #{tpu_custom_call.1} parent=39 // pred_fallthru
          _
        %v716 = vld [vmem:[%s269] sm:$0xff]
        %v717 = vld [vmem:[%s262] sm:$0xff]
        %vm718 = vcmp.eq.s32.totalorder %v716, 0
        %v719 = vsel %vm718, 1, 0
        %v720 = vcvt.s32.f32 %v719
        %v721 = vld [vmem:[%s2] sm:$0x1]
        %723 = vset.pattern.permute.xlu0 0
        %724 = vperm.xlu0 %723, %v720
        %v725 = vpop.permute.xlu0 %724
        %v727 = vlaneseq
        %v728 = vshrl.u32 %v727, 7
        %v729 = vsub.s32 0, %v728
        %v730 = vrot.slane %v721, %v729
        %v731 = vmul.f32 %v725, %v730
        %v732 = vadd.f32 %v717, %v731
        %vm733 = vcmp.eq.s32.totalorder %v716, 1
        %v734 = vsel %vm733, 1, 0
        %v735 = vcvt.s32.f32 %v734
        %v736 = vld [vmem:[%s2 + $0x1] sm:$0x1]
        %738 = vset.pattern.permute.xlu0 0
        %739 = vperm.xlu0 %738, %v735
        %v740 = vpop.permute.xlu0 %739
        %v742 = vlaneseq
        %v743 = vshrl.u32 %v742, 7
        %v744 = vsub.s32 0, %v743
        %v745 = vrot.slane %v736, %v744
        %v746 = vmul.f32 %v740, %v745
        %v747 = vadd.f32 %v732, %v746
        %749 = dma.done [#allocation3], 16
        %751 = dma.done %s335, 16
        %753 = dma.done %s391, 16
        %755 = dma.done %s447, 16
        %757 = dma.done %s503, 16
        %759 = dma.done %s559, 16
        %761 = dma.done %s615, 16
        %763 = dma.done %s671, 16
        %v764 = vld [vmem:[#allocation2] sm:$0xff]
        %v765 = vadd.f32 %v764, %v747
        %vm766 = vcmask 261120
        %v767 = vsel %vm766, %v765, 0.0
        %768 = vadd.xlane.f32.xlu0 %v767
        %v769 = vpop.xlane.xlu0 %768
        %v770 = vrcp.pop 32.0
        %v771 = vmul.f32 %v769, %v770
        %v772 = vsub.f32 %v765, %v771
        %v773 = vmul.f32 %v772, %v772
        %v774 = vsel %vm766, %v773, 0.0
        %775 = vadd.xlane.f32.xlu0 %v774
        %v776 = vpop.xlane.xlu0 %775
        %v777 = vmul.f32 %v776, %v770
        %v778 = vadd.f32 %v777, 1e-12
        %v779 = vrsqrt.pop %v778
        %v780 = vmul.f32 %v772, %v779
        %v781 = vld [vmem:[%s4] sm:$0x1]
        %v783 = vlaneseq
        %v784 = vshrl.u32 %v783, 7
        %v785 = vsub.s32 0, %v784
        %v786 = vrot.slane %v781, %v785
        %v788 = vmul.f32 %v786, %v780
        %v789 = vld [vmem:[%s5] sm:$0x1]
        %v791 = vlaneseq
        %v792 = vshrl.u32 %v791, 7
        %v793 = vsub.s32 0, %v792
        %v794 = vrot.slane %v789, %v793
        %v796 = vadd.f32 %v788, %v794
        %797 = vst.msk [vmem:[%s258] sm:$0xff] %vm766, %v796
        %s798 = sand.u32 %s166, 1
        %s799 = scalar_lea.sflag [#allocation7], %s798
        %s800 = sand.u32 %s166, 1
        %s801 = smul.addr %s800, 8
        %s802 = scalar_lea.vmem [#allocation6], %s801
        // Predicated region
        $region281: #{tpu_custom_call.1} parent=39 // pred_check
          %p803 = pneg %p176
        $region282: #{tpu_custom_call.1} parent=39 // pred_check_branch
          %805 = sbr.rel (%p803) target = $region284
        $region283: #{tpu_custom_call.1} parent=39 // pred_region
          %s807 = ssub.s32 128, 128
          %808 = vsyncadd %s799, %s807
          %s809 = sadd.s32 %s32, %s31
          %s810 = smul.addr %s809, 128
          %s811 = scalar_lea.hbm %s7, %s810
          %s813 = sshll.u32 %s802, 4
          %s814 = int_to_ptr.vmem [resolvable:$true] %s813
          %816 = dma.vmem_to_hbm [thread:$0]  %s814, 128, %s811, %s799
        $region284: #{tpu_custom_call.1} parent=39 // pred_fallthru
          _
      $region40: #{tpu_custom_call.1} parent=5 // pred_fallthru
        _
      %p817 = scmp.le.s32.totalorder 2, %s22
      // Predicated region
      $region285: #{tpu_custom_call.1} parent=5 // pred_check
        %p818 = pneg %p817
      $region286: #{tpu_custom_call.1} parent=5 // pred_check_branch
        %820 = sbr.rel (%p818) target = $region288
      $region287: #{tpu_custom_call.1} parent=5 // pred_region
        %s821 = ssub.s32 %s22, 2
        // Predicated region
        $region289: #{tpu_custom_call.1} parent=287 // pred_check
          %p822 = pneg %p182
        $region290: #{tpu_custom_call.1} parent=287 // pred_check_branch
          %824 = sbr.rel (%p822) target = $region292
        $region291: #{tpu_custom_call.1} parent=287 // pred_region
          %s825 = sand.u32 %s167, 1
          %s826 = scalar_lea.sflag [#allocation7], %s825
          %s827 = sand.u32 %s167, 1
          %s828 = smul.addr %s827, 8
          %s829 = scalar_lea.vmem [#allocation6], %s828
          %830 = dma.done %s826, 128
        $region292: #{tpu_custom_call.1} parent=287 // pred_fallthru
          _
      $region288: #{tpu_custom_call.1} parent=5 // pred_fallthru
        _
    $region6: #{tpu_custom_call.1} parent=1 // loop_footer
      %s26 = sadd.s32 1, %s22
    $region7: #{tpu_custom_call.1} parent=1 // loop_footer_branch
      %21 = sbr.rel target = $region3
    $region8: #{tpu_custom_call.1} parent=1 // loop_exit
      _
    %831 = vsyncpa [#allocation7], 1
    %s832 = scalar_lea.sflag [#allocation7], 1
    %833 = vsyncpa %s832, 1
  %834 = vsyncmov [#allocation3]
  %s835 = vpop.sfrf %834
  %p836 = scmp.eq.s32.totalorder %s835, 0
  %p837 = pneg %p836
  %839 = shalt.err (%p837)
  %s840 = scalar_lea.sflag [#allocation3], 1
  %841 = vsyncmov %s840
  %s842 = vpop.sfrf %841
  %p843 = scmp.eq.s32.totalorder %s842, 0
  %p844 = pneg %p843
  %846 = shalt.err (%p844)
  %s847 = scalar_lea.sflag [#allocation3], 2
  %848 = vsyncmov %s847
  %s849 = vpop.sfrf %848
  %p850 = scmp.eq.s32.totalorder %s849, 0
  %p851 = pneg %p850
  %853 = shalt.err (%p851)
  %s854 = scalar_lea.sflag [#allocation3], 3
  %855 = vsyncmov %s854
  %s856 = vpop.sfrf %855
  %p857 = scmp.eq.s32.totalorder %s856, 0
  %p858 = pneg %p857
  %860 = shalt.err (%p858)
  %s861 = scalar_lea.sflag [#allocation3], 4
  %862 = vsyncmov %s861
  %s863 = vpop.sfrf %862
  %p864 = scmp.eq.s32.totalorder %s863, 0
  %p865 = pneg %p864
  %867 = shalt.err (%p865)
  %s868 = scalar_lea.sflag [#allocation3], 5
  %869 = vsyncmov %s868
  %s870 = vpop.sfrf %869
  %p871 = scmp.eq.s32.totalorder %s870, 0
  %p872 = pneg %p871
  %874 = shalt.err (%p872)
  %s875 = scalar_lea.sflag [#allocation3], 6
  %876 = vsyncmov %s875
  %s877 = vpop.sfrf %876
  %p878 = scmp.eq.s32.totalorder %s877, 0
  %p879 = pneg %p878
  %881 = shalt.err (%p879)
  %s882 = scalar_lea.sflag [#allocation3], 7
  %883 = vsyncmov %s882
  %s884 = vpop.sfrf %883
  %p885 = scmp.eq.s32.totalorder %s884, 0
  %p886 = pneg %p885
  %888 = shalt.err (%p886)

</llo_original>
